<compile_context>
chip_gen: v7x
topology: tpu7x:2x2x1
jax: 0.10.0
libtpu: 0.0.40
codegen_flags: <defaults>
</compile_context>

<pallas_src>
import numpy as np
import jax
import jax.numpy as jnp
from jax.experimental import pallas as pl
from jax.experimental.pallas import tpu as pltpu


# ----------------------------------------------------------------------------
# VMEM budgeting
# ----------------------------------------------------------------------------
_VMEM_FLOOR = 32 * 1024 * 1024          # explicit floor (>= default scoped limits)
_VMEM_CAP = 100 * 1024 * 1024           # stay below 128 MiB physical (v5e/v6e)
_FUSED_VMEM_BUDGET = 48 * 1024 * 1024   # conservative vs v7x 64 MiB physical


def _clamp_vmem(needed_bytes):
    return int(min(max(needed_bytes * 5 // 4, _VMEM_FLOOR), _VMEM_CAP))


def _fused_vmem_bytes(n_pad, f_pad, num_layers, isz):
    inputs = (2 * n_pad * n_pad * isz            # A_pos, A_neg (counts)
              + 2 * n_pad * 4                    # 1/deg columns (f32)
              + n_pad * f_pad * isz              # x
              + num_layers * (3 * f_pad * f_pad * isz + f_pad * 4))
    out = n_pad * f_pad * 4
    interm = 3 * n_pad * f_pad * 4               # p, n, acc live in f32
    # The default pipeliner double-buffers every block, even with grid=(1,).
    # TODO(synk): verify via pl.lower_as_mlir and drop to pl.Buffered(1) specs.
    return 2 * (inputs + out) + interm


def _tiled_vmem_bytes(n_pad, f_pad, tile_n, isz, out_isz):
    inputs = (2 * tile_n * n_pad * isz           # A_pos / A_neg row slabs
              + 2 * tile_n * 4                   # 1/deg slabs (f32)
              + n_pad * f_pad * isz              # z (resident, same block)
              + 3 * f_pad * f_pad * isz + f_pad * 4)
    out = tile_n * f_pad * out_isz
    interm = 3 * tile_n * f_pad * 4
    return 2 * (inputs + out) + interm


# ----------------------------------------------------------------------------
# Kernels
# ----------------------------------------------------------------------------
def make_fused_sgcn_kernel(num_layers, compute_dtype):
    """kernel(apos, aneg, dinv_pos, dinv_neg, x, [W1,W2,W3,b]*L, out)."""

    def kernel(*refs):
        apos_ref, aneg_ref, dpos_ref, dneg_ref, x_ref = refs[:5]
        w_refs = refs[5:5 + 4 * num_layers]
        out_ref = refs[5 + 4 * num_layers]

        apos = apos_ref[...]                 # edge counts, compute_dtype (exact)
        aneg = aneg_ref[...]
        dpos = dpos_ref[...]                 # f32 (N_pad, 1) inverse degrees
        dneg = dneg_ref[...]
        z = x_ref[...]                       # compute_dtype (N_pad, F_pad)

        zf = None
        for l in range(num_layers):          # static unroll: one launch total
            w1 = w_refs[4 * l + 0][...]
            w2 = w_refs[4 * l + 1][...]
            w3 = w_refs[4 * l + 2][...]
            b = w_refs[4 * l + 3][...]       # f32 (1, F_pad)

            # Mean aggregation: count matmul with f32 accumulation, then the
            # f32 1/deg row scale on the VPU (hidden under MXU-bound matmuls).
            p = (jnp.dot(apos, z, preferred_element_type=jnp.float32)
                 * dpos).astype(compute_dtype)
            n = (jnp.dot(aneg, z, preferred_element_type=jnp.float32)
                 * dneg).astype(compute_dtype)

            # Packed-weight transform: 3 full-lane-width matmuls, f32 acc.
            acc = (jnp.dot(p, w1, preferred_element_type=jnp.float32)
                   + jnp.dot(n, w2, preferred_element_type=jnp.float32)
                   + jnp.dot(z, w3, preferred_element_type=jnp.float32)
                   + b)

            zf = jnp.tanh(acc)               # f32 epilogue (EUP), v5e-safe
            z = zf.astype(compute_dtype)     # feed next layer in compute dtype

        out_ref[...] = zf                    # lane-dense (F_pad % 128 == 0)

    return kernel


def make_layer_kernel(tile_n, compute_dtype):
    """Row-tiled single SGCNConv layer (+tanh); grid axis = node-row tiles."""

    def kernel(apos_ref, aneg_ref, dpos_ref, dneg_ref, z_ref,
               w1_ref, w2_ref, w3_ref, b_ref, out_ref):
        z = z_ref[...]                                        # full (N_pad, F_pad)
        row0 = pl.multiple_of(pl.program_id(0) * tile_n, tile_n)
        z_tile = z_ref[pl.ds(row0, tile_n), :]                # this tile's rows

        p = (jnp.dot(apos_ref[...], z, preferred_element_type=jnp.float32)
             * dpos_ref[...]).astype(compute_dtype)
        n = (jnp.dot(aneg_ref[...], z, preferred_element_type=jnp.float32)
             * dneg_ref[...]).astype(compute_dtype)

        acc = (jnp.dot(p, w1_ref[...], preferred_element_type=jnp.float32)
               + jnp.dot(n, w2_ref[...], preferred_element_type=jnp.float32)
               + jnp.dot(z_tile, w3_ref[...], preferred_element_type=jnp.float32)
               + b_ref[...])
        out_ref[...] = jnp.tanh(acc).astype(out_ref.dtype)

    return kernel


# ----------------------------------------------------------------------------
# Host-side weight packing / padding helpers
# ----------------------------------------------------------------------------
def _round_up(x, m):
    return ((x + m - 1) // m) * m


def _full_spec(shape):
    nd = len(shape)
    return pl.BlockSpec(shape, lambda i, _nd=nd: (0,) * _nd)


def _pack_first_params(params, in_dim, H, F_pad):
    """first_aggr=True: out = [P@wpl | 0] + [0 | N@wnl] + x@[wpr|wnr] + [bpr|bnr]."""
    wpl, wpr, bpr, wnl, wnr, bnr = params
    W1 = jnp.zeros((F_pad, F_pad), jnp.float32).at[:in_dim, :H].set(wpl)
    W2 = jnp.zeros((F_pad, F_pad), jnp.float32).at[:in_dim, H:2 * H].set(wnl)
    W3 = (jnp.zeros((F_pad, F_pad), jnp.float32)
          .at[:in_dim, :H].set(wpr)
          .at[:in_dim, H:2 * H].set(wnr))
    b = (jnp.zeros((1, F_pad), jnp.float32)
         .at[:, :H].set(bpr)
         .at[:, H:2 * H].set(bnr))
    return W1, W2, W3, b


def _pack_deep_params(params, H, F_pad):
    """first_aggr=False, block-assembled so no in-kernel concat / slice.

    P = A_pos @ z, N = A_neg @ z, z = [z_pos | z_neg]:
      out_pos = P[:, :H] @ wpl_top + N[:, H:] @ wpl_bot + z_pos @ wpr + bpr
      out_neg = P[:, H:] @ wnl_top + N[:, :H] @ wnl_bot + z_neg @ wnr + bnr
    """
    wpl, wpr, bpr, wnl, wnr, bnr = params      # wpl/wnl: (2H, H)
    W1 = (jnp.zeros((F_pad, F_pad), jnp.float32)
          .at[:H, :H].set(wpl[:H])             # wpl_top -> out_pos
          .at[H:2 * H, H:2 * H].set(wnl[:H]))  # wnl_top -> out_neg
    W2 = (jnp.zeros((F_pad, F_pad), jnp.float32)
          .at[H:2 * H, :H].set(wpl[H:])        # wpl_bot -> out_pos
          .at[:H, H:2 * H].set(wnl[H:]))       # wnl_bot -> out_neg
    W3 = (jnp.zeros((F_pad, F_pad), jnp.float32)
          .at[:H, :H].set(wpr)
          .at[H:2 * H, H:2 * H].set(wnr))
    b = (jnp.zeros((1, F_pad), jnp.float32)
         .at[:, :H].set(bpr)
         .at[:, H:2 * H].set(bnr))
    return W1, W2, W3, b


# ----------------------------------------------------------------------------
# pallas_call wrappers
# ----------------------------------------------------------------------------
def _fused_forward(apos_p, aneg_p, dpos_p, dneg_p, x_p, layer_weights, cdt):
    n_pad, f_pad = x_p.shape
    num_layers = len(layer_weights)
    isz = jnp.dtype(cdt).itemsize

    args = [apos_p, aneg_p, dpos_p, dneg_p, x_p]
    for (w1, w2, w3, b) in layer_weights:
        args += [w1, w2, w3, b]

    flops = num_layers * (2 * 2 * n_pad * n_pad * f_pad
                          + 3 * 2 * n_pad * f_pad * f_pad)
    bytes_accessed = (sum(int(a.size) * a.dtype.itemsize for a in args)
                      + n_pad * f_pad * 4)
    cost = pl.CostEstimate(flops=flops,
                           transcendentals=num_layers * n_pad * f_pad,
                           bytes_accessed=bytes_accessed)

    vmem_limit = _clamp_vmem(_fused_vmem_bytes(n_pad, f_pad, num_layers, isz))

    return pl.pallas_call(
        make_fused_sgcn_kernel(num_layers, cdt),
        grid=(1,),
        in_specs=[_full_spec(a.shape) for a in args],
        out_specs=_full_spec((n_pad, f_pad)),
        out_shape=jax.ShapeDtypeStruct((n_pad, f_pad), jnp.float32),
        compiler_params=pltpu.CompilerParams(
            dimension_semantics=("arbitrary",),
            vmem_limit_bytes=vmem_limit),
        cost_estimate=cost,
    )(*args)


def _tiled_layer(apos_p, aneg_p, dpos_p, dneg_p, z, weights, cdt, out_dtype,
                 tile_n):
    n_pad, f_pad = z.shape
    w1, w2, w3, b = weights
    isz = jnp.dtype(cdt).itemsize
    out_isz = jnp.dtype(out_dtype).itemsize

    args = (apos_p, aneg_p, dpos_p, dneg_p, z, w1, w2, w3, b)
    flops = 2 * 2 * n_pad * n_pad * f_pad + 3 * 2 * n_pad * f_pad * f_pad
    bytes_accessed = (sum(int(a.size) * a.dtype.itemsize for a in args)
                      + n_pad * f_pad * out_isz)
    cost = pl.CostEstimate(flops=flops, transcendentals=n_pad * f_pad,
                           bytes_accessed=bytes_accessed)

    vmem_limit = _clamp_vmem(
        _tiled_vmem_bytes(n_pad, f_pad, tile_n, isz, out_isz))

    return pl.pallas_call(
        make_layer_kernel(tile_n, cdt),
        grid=(n_pad // tile_n,),
        in_specs=[
            pl.BlockSpec((tile_n, n_pad), lambda i: (i, 0)),   # A_pos row slab
            pl.BlockSpec((tile_n, n_pad), lambda i: (i, 0)),   # A_neg row slab
            pl.BlockSpec((tile_n, 1), lambda i: (i, 0)),       # 1/deg pos
            pl.BlockSpec((tile_n, 1), lambda i: (i, 0)),       # 1/deg neg
            pl.BlockSpec((n_pad, f_pad), lambda i: (0, 0)),    # z (resident)
            pl.BlockSpec((f_pad, f_pad), lambda i: (0, 0)),    # W1
            pl.BlockSpec((f_pad, f_pad), lambda i: (0, 0)),    # W2
            pl.BlockSpec((f_pad, f_pad), lambda i: (0, 0)),    # W3
            pl.BlockSpec((1, f_pad), lambda i: (0, 0)),        # bias
        ],
        out_specs=pl.BlockSpec((tile_n, f_pad), lambda i: (i, 0)),
        out_shape=jax.ShapeDtypeStruct((n_pad, f_pad), out_dtype),
        compiler_params=pltpu.CompilerParams(
            # Row tiles are independent -> both v7x TensorCores split the grid.
            dimension_semantics=("parallel",),
            vmem_limit_bytes=vmem_limit),
        cost_estimate=cost,
    )(*args)


def sgcn_forward(apos_cnt, dinv_pos, aneg_cnt, dinv_neg, x,
                 conv1_params, deep_params, *,
                 compute_dtype=jnp.bfloat16, mode="auto", tile_n=256):
    """SGCN.forward(): z = tanh(conv1(x)); z = tanh(conv_l(z)) for deep layers.

    apos_cnt/aneg_cnt: (N, N) signed-edge count matrices (dst rows, src cols).
    dinv_pos/dinv_neg: (N, 1) f32 inverse in-degrees (0 where deg == 0).
    """
    N, in_dim = x.shape
    H = conv1_params[0].shape[1]
    out_dim = 2 * H

    # Lane-dense feature slab shared by every layer; node dim padded to 128 so
    # A_pos/A_neg lane dims and the aggregation K dim are fully MXU-aligned
    # and row tiles are clean multiples.
    F_pad = max(_round_up(in_dim, 128), _round_up(out_dim, 128))
    N_pad = _round_up(N, 128)
    cdt = compute_dtype

    # Padding note: padded node rows are NOT inert (the broadcast bias turns
    # them into tanh(b) after layer 1), but the padded adjacency *columns* are
    # zero so they never mix into real rows; they are sliced off on return.
    apos_p = (jnp.zeros((N_pad, N_pad), jnp.float32)
              .at[:N, :N].set(apos_cnt).astype(cdt))     # small counts: exact in bf16
    aneg_p = (jnp.zeros((N_pad, N_pad), jnp.float32)
              .at[:N, :N].set(aneg_cnt).astype(cdt))
    dpos_p = jnp.zeros((N_pad, 1), jnp.float32).at[:N].set(dinv_pos)
    dneg_p = jnp.zeros((N_pad, 1), jnp.float32).at[:N].set(dinv_neg)
    x_p = (jnp.zeros((N_pad, F_pad), jnp.float32)
           .at[:N, :in_dim].set(x).astype(cdt))

    packed = [_pack_first_params(conv1_params, in_dim, H, F_pad)]
    for p in deep_params:
        packed.append(_pack_deep_params(p, H, F_pad))
    num_layers = len(packed)
    layer_weights = [(w1.astype(cdt), w2.astype(cdt), w3.astype(cdt), b)
                     for (w1, w2, w3, b) in packed]       # bias stays f32

    if mode == "auto":
        needed = _fused_vmem_bytes(N_pad, F_pad, num_layers,
                                   jnp.dtype(cdt).itemsize)
        mode = "fused" if needed <= _FUSED_VMEM_BUDGET else "tiled"

    if mode == "fused":
        z_pad = _fused_forward(apos_p, aneg_p, dpos_p, dneg_p, x_p,
                               layer_weights, cdt)
    else:
        tile_n = min(tile_n, N_pad)
        if N_pad % tile_n != 0:
            tile_n = 128
        z = x_p
        for l, weights in enumerate(layer_weights):
            last = (l == num_layers - 1)
            z = _tiled_layer(apos_p, aneg_p, dpos_p, dneg_p, z, weights, cdt,
                             jnp.float32 if last else cdt, tile_n)
        z_pad = z

    # TODO(synk): for very large N replace the dense (N,N) count matrices with
    # a CSR scalar-prefetch gather; and if H >= 128, swap the zero-padded
    # block weights for tight per-block matmuls (second-order at these sizes).
    return z_pad[:N, :out_dim]


# ----------------------------------------------------------------------------
# Glue: adjacency construction, parameter init, reference
# ----------------------------------------------------------------------------
def build_count_adjacency(edge_index, node_num):
    """Edge-count matrix (dst rows, src cols) + f32 inverse in-degree column.

    mean_{(j,i) in E} x[j] == ((counts @ x) * dinv)[i]; nodes with no incoming
    edge get an all-zero row (scatter_mean semantics)."""
    src = jnp.asarray(edge_index[0], jnp.int32)
    dst = jnp.asarray(edge_index[1], jnp.int32)
    cnt = jnp.zeros((node_num, node_num), jnp.float32).at[dst, src].add(1.0)
    deg = cnt.sum(axis=1, keepdims=True)
    dinv = jnp.where(deg > 0, 1.0 / deg, 0.0)
    return cnt, dinv


def init_linear(key, fan_in, fan_out, with_bias):
    wkey, bkey = jax.random.split(key)
    bound = 1.0 / jnp.sqrt(jnp.float32(fan_in))
    w = jax.random.uniform(wkey, (fan_in, fan_out), jnp.float32, -bound, bound)
    if with_bias:
        b = jax.random.uniform(bkey, (1, fan_out), jnp.float32, -bound, bound)
    else:
        b = jnp.zeros((1, fan_out), jnp.float32)
    return w, b


def init_conv_params(key, in_dim, out_half, first_aggr):
    """Weights for one SGCNConv: lin_pos_l (no bias), lin_pos_r (bias),
    lin_neg_l (no bias), lin_neg_r (bias)."""
    l_in = in_dim if first_aggr else 2 * in_dim
    k1, k2, k3, k4 = jax.random.split(key, 4)
    wpl, _ = init_linear(k1, l_in, out_half, False)
    wpr, bpr = init_linear(k2, in_dim, out_half, True)
    wnl, _ = init_linear(k3, l_in, out_half, False)
    wnr, bnr = init_linear(k4, in_dim, out_half, True)
    return (wpl, wpr, bpr, wnl, wnr, bnr)


def ref_forward(apos, aneg, x, conv1_params, deep_params):
    """Pure-JAX f32 reference mirroring torch_geometric SignedConv semantics."""
    wpl, wpr, bpr, wnl, wnr, bnr = conv1_params
    op = (apos @ x) @ wpl + x @ wpr + bpr
    on = (aneg @ x) @ wnl + x @ wnr + bnr
    z = jnp.tanh(jnp.concatenate([op, on], axis=-1))
    for (wpl, wpr, bpr, wnl, wnr, bnr) in deep_params:
        H = z.shape[-1] // 2
        zp, zn = z[:, :H], z[:, H:]
        cat_p = jnp.concatenate([apos @ zp, aneg @ zn], axis=-1)
        cat_n = jnp.concatenate([apos @ zn, aneg @ zp], axis=-1)
        op = cat_p @ wpl + zp @ wpr + bpr
        on = cat_n @ wnl + zn @ wnr + bnr
        z = jnp.tanh(jnp.concatenate([op, on], axis=-1))
    return z


# ----------------------------------------------------------------------------
# Main
# ----------------------------------------------------------------------------
if __name__ == "__main__":
    node_num = 32
    in_dim = 64
    out_dim = 64
    layer_num = 2
    num_edges = 96
    H = out_dim // 2

    key = jax.random.PRNGKey(0)
    k_src, k_dst, k_sign, k_emb, k_c1, k_deep = jax.random.split(key, 6)

    # Signed edge list (E, 3): [src, dst, sign], mimicking edge_index_s.
    src = jax.random.randint(k_src, (num_edges,), 0, node_num, jnp.int32)
    dst = jax.random.randint(k_dst, (num_edges,), 0, node_num, jnp.int32)
    sign = jnp.where(jax.random.uniform(k_sign, (num_edges,)) < 0.5, 1, -1)
    edge_index_s = np.asarray(jnp.stack([src, dst, sign.astype(jnp.int32)], axis=1))

    # Host-side (numpy) boolean filtering — dynamic shapes stay off the jit
    # path; mirrors SGCN.__init__'s pos_edge_index / neg_edge_index split.
    pos_edge_index = edge_index_s[edge_index_s[:, 2] > 0][:, :2].T
    neg_edge_index = edge_index_s[edge_index_s[:, 2] < 0][:, :2].T

    apos_cnt, dinv_pos = build_count_adjacency(pos_edge_index, node_num)
    aneg_cnt, dinv_neg = build_count_adjacency(neg_edge_index, node_num)

    # TODO(synk): create_spectral_features (TSVD init) not ported; the module
    # accepts an explicit init_emb, so we supply a deterministic one.
    x = jax.random.normal(k_emb, (node_num, in_dim), jnp.float32)

    conv1_params = init_conv_params(k_c1, in_dim, H, first_aggr=True)
    deep_params = [init_conv_params(jax.random.fold_in(k_deep, i), H, H,
                                    first_aggr=False)
                   for i in range(layer_num - 1)]
    # TODO(synk): norm_emb=True branch (F.normalize inside SGCNConv) not
    # implemented; SGCN default norm_emb=False is reproduced here.

    z_ref = ref_forward(apos_cnt * dinv_pos, aneg_cnt * dinv_neg, x,
                        conv1_params, deep_params)

    common = (apos_cnt, dinv_pos, aneg_cnt, dinv_neg, x,
              conv1_params, deep_params)

    # f32, fused single launch (exact vs reference).
    z = jax.block_until_ready(
        sgcn_forward(*common, compute_dtype=jnp.float32, mode="fused"))
    assert z.shape == (node_num, out_dim)
    assert jnp.allclose(z, z_ref, atol=1e-4, rtol=1e-4), "f32 fused mismatch"

    # f32, row-tiled per-layer path (the large-N / v7x path), exercised here too.
    z_t = jax.block_until_ready(
        sgcn_forward(*common, compute_dtype=jnp.float32, mode="tiled"))
    assert z_t.shape == (node_num, out_dim)
    assert jnp.allclose(z_t, z_ref, atol=1e-4, rtol=1e-4), "f32 tiled mismatch"

    # Default path: bf16 operands, f32 accumulation/epilogue, auto mode
    # (fused at this size). Tolerance tightened vs v1 since 1/deg stays f32.
    z_bf = jax.block_until_ready(sgcn_forward(*common))
    assert z_bf.shape == (node_num, out_dim)
    assert jnp.allclose(z_bf, z_ref, atol=5e-2), "bf16 fused mismatch"

    # bf16 row-tiled path.
    z_bf_t = jax.block_until_ready(sgcn_forward(*common, mode="tiled"))
    assert jnp.allclose(z_bf_t, z_ref, atol=5e-2), "bf16 tiled mismatch"

    print("KERNEL_OK")
</pallas_src>

<mosaic_0001>
module attributes {stable_mosaic.version = 11 : i64} {
  func.func @kernel(%arg0: i32, %arg1: memref<128x128xf32, #tpu.memory_space<vmem>>, %arg2: memref<128x128xf32, #tpu.memory_space<vmem>>, %arg3: memref<128x1xf32, #tpu.memory_space<vmem>>, %arg4: memref<128x1xf32, #tpu.memory_space<vmem>>, %arg5: memref<128x128xf32, #tpu.memory_space<vmem>>, %arg6: memref<128x128xf32, #tpu.memory_space<vmem>>, %arg7: memref<128x128xf32, #tpu.memory_space<vmem>>, %arg8: memref<128x128xf32, #tpu.memory_space<vmem>>, %arg9: memref<1x128xf32, #tpu.memory_space<vmem>>, %arg10: memref<128x128xf32, #tpu.memory_space<vmem>>, %arg11: memref<128x128xf32, #tpu.memory_space<vmem>>, %arg12: memref<128x128xf32, #tpu.memory_space<vmem>>, %arg13: memref<1x128xf32, #tpu.memory_space<vmem>>, %arg14: memref<128x128xf32, #tpu.memory_space<vmem>>) attributes {dimension_semantics = [#tpu.dimension_semantics<arbitrary>], iteration_bounds = array<i64: 1>, scalar_prefetch = 0 : i64, scratch_operands = 0 : i64, tpu.core_type = #tpu.core_type<tc>, window_params = [{pipeline_mode = #tpu.pipeline_mode<synchronous>, transform_indices = @transform_0, window_bounds = array<i64: 128, 128>}, {pipeline_mode = #tpu.pipeline_mode<synchronous>, transform_indices = @transform_1, window_bounds = array<i64: 128, 128>}, {pipeline_mode = #tpu.pipeline_mode<synchronous>, transform_indices = @transform_2, window_bounds = array<i64: 128, 1>}, {pipeline_mode = #tpu.pipeline_mode<synchronous>, transform_indices = @transform_3, window_bounds = array<i64: 128, 1>}, {pipeline_mode = #tpu.pipeline_mode<synchronous>, transform_indices = @transform_4, window_bounds = array<i64: 128, 128>}, {pipeline_mode = #tpu.pipeline_mode<synchronous>, transform_indices = @transform_5, window_bounds = array<i64: 128, 128>}, {pipeline_mode = #tpu.pipeline_mode<synchronous>, transform_indices = @transform_6, window_bounds = array<i64: 128, 128>}, {pipeline_mode = #tpu.pipeline_mode<synchronous>, transform_indices = @transform_7, window_bounds = array<i64: 128, 128>}, {pipeline_mode = #tpu.pipeline_mode<synchronous>, transform_indices = @transform_8, window_bounds = array<i64: 1, 128>}, {pipeline_mode = #tpu.pipeline_mode<synchronous>, transform_indices = @transform_9, window_bounds = array<i64: 128, 128>}, {pipeline_mode = #tpu.pipeline_mode<synchronous>, transform_indices = @transform_10, window_bounds = array<i64: 128, 128>}, {pipeline_mode = #tpu.pipeline_mode<synchronous>, transform_indices = @transform_11, window_bounds = array<i64: 128, 128>}, {pipeline_mode = #tpu.pipeline_mode<synchronous>, transform_indices = @transform_12, window_bounds = array<i64: 1, 128>}, {pipeline_mode = #tpu.pipeline_mode<synchronous>, transform_indices = @transform_13, window_bounds = array<i64: 128, 128>}]} {
    %c0 = arith.constant 0 : index
    %c0_0 = arith.constant 0 : index
    %0 = vector.load %arg1[%c0, %c0_0] : memref<128x128xf32, #tpu.memory_space<vmem>>, vector<128x128xf32>
    %c0_1 = arith.constant 0 : index
    %c0_2 = arith.constant 0 : index
    %1 = vector.load %arg2[%c0_1, %c0_2] : memref<128x128xf32, #tpu.memory_space<vmem>>, vector<128x128xf32>
    %c0_3 = arith.constant 0 : index
    %c0_4 = arith.constant 0 : index
    %2 = vector.load %arg3[%c0_3, %c0_4] : memref<128x1xf32, #tpu.memory_space<vmem>>, vector<128x1xf32>
    %c0_5 = arith.constant 0 : index
    %c0_6 = arith.constant 0 : index
    %3 = vector.load %arg4[%c0_5, %c0_6] : memref<128x1xf32, #tpu.memory_space<vmem>>, vector<128x1xf32>
    %c0_7 = arith.constant 0 : index
    %c0_8 = arith.constant 0 : index
    %4 = vector.load %arg5[%c0_7, %c0_8] : memref<128x128xf32, #tpu.memory_space<vmem>>, vector<128x128xf32>
    %c0_9 = arith.constant 0 : index
    %c0_10 = arith.constant 0 : index
    %5 = vector.load %arg6[%c0_9, %c0_10] : memref<128x128xf32, #tpu.memory_space<vmem>>, vector<128x128xf32>
    %c0_11 = arith.constant 0 : index
    %c0_12 = arith.constant 0 : index
    %6 = vector.load %arg7[%c0_11, %c0_12] : memref<128x128xf32, #tpu.memory_space<vmem>>, vector<128x128xf32>
    %c0_13 = arith.constant 0 : index
    %c0_14 = arith.constant 0 : index
    %7 = vector.load %arg8[%c0_13, %c0_14] : memref<128x128xf32, #tpu.memory_space<vmem>>, vector<128x128xf32>
    %c0_15 = arith.constant 0 : index
    %c0_16 = arith.constant 0 : index
    %8 = vector.load %arg9[%c0_15, %c0_16] : memref<1x128xf32, #tpu.memory_space<vmem>>, vector<1x128xf32>
    %cst = arith.constant dense<0.000000e+00> : vector<128x128xf32>
    %9 = tpu.matmul %0, %4, %cst {dimension_numbers = #tpu.dot_dimension_numbers<[1], [0], [0], [1], [0, 0, 1, 1], [], []>} : vector<128x128xf32>, vector<128x128xf32>, vector<128x128xf32> -> vector<128x128xf32>
    %10 = vector.broadcast %2 : vector<128x1xf32> to vector<128x128xf32>
    %11 = arith.mulf %9, %10 : vector<128x128xf32>
    %cst_17 = arith.constant dense<0.000000e+00> : vector<128x128xf32>
    %12 = tpu.matmul %1, %4, %cst_17 {dimension_numbers = #tpu.dot_dimension_numbers<[1], [0], [0], [1], [0, 0, 1, 1], [], []>} : vector<128x128xf32>, vector<128x128xf32>, vector<128x128xf32> -> vector<128x128xf32>
    %13 = vector.broadcast %3 : vector<128x1xf32> to vector<128x128xf32>
    %14 = arith.mulf %12, %13 : vector<128x128xf32>
    %cst_18 = arith.constant dense<0.000000e+00> : vector<128x128xf32>
    %15 = tpu.matmul %11, %5, %cst_18 {dimension_numbers = #tpu.dot_dimension_numbers<[1], [0], [0], [1], [0, 0, 1, 1], [], []>} : vector<128x128xf32>, vector<128x128xf32>, vector<128x128xf32> -> vector<128x128xf32>
    %cst_19 = arith.constant dense<0.000000e+00> : vector<128x128xf32>
    %16 = tpu.matmul %14, %6, %cst_19 {dimension_numbers = #tpu.dot_dimension_numbers<[1], [0], [0], [1], [0, 0, 1, 1], [], []>} : vector<128x128xf32>, vector<128x128xf32>, vector<128x128xf32> -> vector<128x128xf32>
    %17 = arith.addf %15, %16 : vector<128x128xf32>
    %cst_20 = arith.constant dense<0.000000e+00> : vector<128x128xf32>
    %18 = tpu.matmul %4, %7, %cst_20 {dimension_numbers = #tpu.dot_dimension_numbers<[1], [0], [0], [1], [0, 0, 1, 1], [], []>} : vector<128x128xf32>, vector<128x128xf32>, vector<128x128xf32> -> vector<128x128xf32>
    %19 = arith.addf %17, %18 : vector<128x128xf32>
    %20 = vector.broadcast %8 : vector<1x128xf32> to vector<128x128xf32>
    %21 = arith.addf %19, %20 : vector<128x128xf32>
    %22 = math.tanh %21 : vector<128x128xf32>
    %c0_21 = arith.constant 0 : index
    %c0_22 = arith.constant 0 : index
    %23 = vector.load %arg10[%c0_21, %c0_22] : memref<128x128xf32, #tpu.memory_space<vmem>>, vector<128x128xf32>
    %c0_23 = arith.constant 0 : index
    %c0_24 = arith.constant 0 : index
    %24 = vector.load %arg11[%c0_23, %c0_24] : memref<128x128xf32, #tpu.memory_space<vmem>>, vector<128x128xf32>
    %c0_25 = arith.constant 0 : index
    %c0_26 = arith.constant 0 : index
    %25 = vector.load %arg12[%c0_25, %c0_26] : memref<128x128xf32, #tpu.memory_space<vmem>>, vector<128x128xf32>
    %c0_27 = arith.constant 0 : index
    %c0_28 = arith.constant 0 : index
    %26 = vector.load %arg13[%c0_27, %c0_28] : memref<1x128xf32, #tpu.memory_space<vmem>>, vector<1x128xf32>
    %cst_29 = arith.constant dense<0.000000e+00> : vector<128x128xf32>
    %27 = tpu.matmul %0, %22, %cst_29 {dimension_numbers = #tpu.dot_dimension_numbers<[1], [0], [0], [1], [0, 0, 1, 1], [], []>} : vector<128x128xf32>, vector<128x128xf32>, vector<128x128xf32> -> vector<128x128xf32>
    %28 = vector.broadcast %2 : vector<128x1xf32> to vector<128x128xf32>
    %29 = arith.mulf %27, %28 : vector<128x128xf32>
    %cst_30 = arith.constant dense<0.000000e+00> : vector<128x128xf32>
    %30 = tpu.matmul %1, %22, %cst_30 {dimension_numbers = #tpu.dot_dimension_numbers<[1], [0], [0], [1], [0, 0, 1, 1], [], []>} : vector<128x128xf32>, vector<128x128xf32>, vector<128x128xf32> -> vector<128x128xf32>
    %31 = vector.broadcast %3 : vector<128x1xf32> to vector<128x128xf32>
    %32 = arith.mulf %30, %31 : vector<128x128xf32>
    %cst_31 = arith.constant dense<0.000000e+00> : vector<128x128xf32>
    %33 = tpu.matmul %29, %23, %cst_31 {dimension_numbers = #tpu.dot_dimension_numbers<[1], [0], [0], [1], [0, 0, 1, 1], [], []>} : vector<128x128xf32>, vector<128x128xf32>, vector<128x128xf32> -> vector<128x128xf32>
    %cst_32 = arith.constant dense<0.000000e+00> : vector<128x128xf32>
    %34 = tpu.matmul %32, %24, %cst_32 {dimension_numbers = #tpu.dot_dimension_numbers<[1], [0], [0], [1], [0, 0, 1, 1], [], []>} : vector<128x128xf32>, vector<128x128xf32>, vector<128x128xf32> -> vector<128x128xf32>
    %35 = arith.addf %33, %34 : vector<128x128xf32>
    %cst_33 = arith.constant dense<0.000000e+00> : vector<128x128xf32>
    %36 = tpu.matmul %22, %25, %cst_33 {dimension_numbers = #tpu.dot_dimension_numbers<[1], [0], [0], [1], [0, 0, 1, 1], [], []>} : vector<128x128xf32>, vector<128x128xf32>, vector<128x128xf32> -> vector<128x128xf32>
    %37 = arith.addf %35, %36 : vector<128x128xf32>
    %38 = vector.broadcast %26 : vector<1x128xf32> to vector<128x128xf32>
    %39 = arith.addf %37, %38 : vector<128x128xf32>
    %40 = math.tanh %39 : vector<128x128xf32>
    %c0_34 = arith.constant 0 : index
    %c0_35 = arith.constant 0 : index
    %41 = vector.load %arg14[%c0_34, %c0_35] : memref<128x128xf32, #tpu.memory_space<vmem>>, vector<128x128xf32>
    tpu.vector_store %arg14[%c0_34, %c0_35], %40 {strides = array<i32>} : memref<128x128xf32, #tpu.memory_space<vmem>>, vector<128x128xf32>,
    return
  }
  func.func @transform_0(%arg0: i32) -> (i32, i32) {
    %c0_i32 = arith.constant 0 : i32
    %c0_i32_0 = arith.constant 0 : i32
    %c0_i32_1 = arith.constant 0 : i32
    return %c0_i32, %c0_i32_0 : i32, i32
  }
  func.func @transform_1(%arg0: i32) -> (i32, i32) {
    %c0_i32 = arith.constant 0 : i32
    %c0_i32_0 = arith.constant 0 : i32
    %c0_i32_1 = arith.constant 0 : i32
    return %c0_i32, %c0_i32_0 : i32, i32
  }
  func.func @transform_2(%arg0: i32) -> (i32, i32) {
    %c0_i32 = arith.constant 0 : i32
    %c0_i32_0 = arith.constant 0 : i32
    %c0_i32_1 = arith.constant 0 : i32
    return %c0_i32, %c0_i32_0 : i32, i32
  }
  func.func @transform_3(%arg0: i32) -> (i32, i32) {
    %c0_i32 = arith.constant 0 : i32
    %c0_i32_0 = arith.constant 0 : i32
    %c0_i32_1 = arith.constant 0 : i32
    return %c0_i32, %c0_i32_0 : i32, i32
  }
  func.func @transform_4(%arg0: i32) -> (i32, i32) {
    %c0_i32 = arith.constant 0 : i32
    %c0_i32_0 = arith.constant 0 : i32
    %c0_i32_1 = arith.constant 0 : i32
    return %c0_i32, %c0_i32_0 : i32, i32
  }
  func.func @transform_5(%arg0: i32) -> (i32, i32) {
    %c0_i32 = arith.constant 0 : i32
    %c0_i32_0 = arith.constant 0 : i32
    %c0_i32_1 = arith.constant 0 : i32
    return %c0_i32, %c0_i32_0 : i32, i32
  }
  func.func @transform_6(%arg0: i32) -> (i32, i32) {
    %c0_i32 = arith.constant 0 : i32
    %c0_i32_0 = arith.constant 0 : i32
    %c0_i32_1 = arith.constant 0 : i32
    return %c0_i32, %c0_i32_0 : i32, i32
  }
  func.func @transform_7(%arg0: i32) -> (i32, i32) {
    %c0_i32 = arith.constant 0 : i32
    %c0_i32_0 = arith.constant 0 : i32
    %c0_i32_1 = arith.constant 0 : i32
    return %c0_i32, %c0_i32_0 : i32, i32
  }
  func.func @transform_8(%arg0: i32) -> (i32, i32) {
    %c0_i32 = arith.constant 0 : i32
    %c0_i32_0 = arith.constant 0 : i32
    %c0_i32_1 = arith.constant 0 : i32
    return %c0_i32, %c0_i32_0 : i32, i32
  }
  func.func @transform_9(%arg0: i32) -> (i32, i32) {
    %c0_i32 = arith.constant 0 : i32
    %c0_i32_0 = arith.constant 0 : i32
    %c0_i32_1 = arith.constant 0 : i32
    return %c0_i32, %c0_i32_0 : i32, i32
  }
  func.func @transform_10(%arg0: i32) -> (i32, i32) {
    %c0_i32 = arith.constant 0 : i32
    %c0_i32_0 = arith.constant 0 : i32
    %c0_i32_1 = arith.constant 0 : i32
    return %c0_i32, %c0_i32_0 : i32, i32
  }
  func.func @transform_11(%arg0: i32) -> (i32, i32) {
    %c0_i32 = arith.constant 0 : i32
    %c0_i32_0 = arith.constant 0 : i32
    %c0_i32_1 = arith.constant 0 : i32
    return %c0_i32, %c0_i32_0 : i32, i32
  }
  func.func @transform_12(%arg0: i32) -> (i32, i32) {
    %c0_i32 = arith.constant 0 : i32
    %c0_i32_0 = arith.constant 0 : i32
    %c0_i32_1 = arith.constant 0 : i32
    return %c0_i32, %c0_i32_0 : i32, i32
  }
  func.func @transform_13(%arg0: i32) -> (i32, i32) {
    %c0_i32 = arith.constant 0 : i32
    %c0_i32_0 = arith.constant 0 : i32
    %c0_i32_1 = arith.constant 0 : i32
    return %c0_i32, %c0_i32_0 : i32, i32
  }
}

</mosaic_0001>

<llo_original>
// kernel: tpu_custom_call.1
$region0: #{tpu_custom_call.1}
  #allocation0 [shape = 'u32[]', space=smem, size = 0x4, offset = 0x4, fixed_abs, tag = 'smem constant byte address 0x4 - core index']
  #allocation1 [shape = 'u32[144,128]{1,0:T(1,128)}', space=vmem, size = 0x12000, scoped, tag = 'internal scratch']
  %s0 = inlined_call_operand.vmem [shape: f32[128,128], index: 0, kind: input, shape index: {}]
  %s1 = inlined_call_operand.vmem [shape: f32[128,128], index: 1, kind: input, shape index: {}]
  %s2 = inlined_call_operand.vmem [shape: f32[128,1], index: 2, kind: input, shape index: {}]
  %s3 = inlined_call_operand.vmem [shape: f32[128,1], index: 3, kind: input, shape index: {}]
  %s4 = inlined_call_operand.hbm [shape: f32[128,128], index: 4, kind: input, shape index: {}]
  %s5 = inlined_call_operand.hbm [shape: f32[128,128], index: 5, kind: input, shape index: {}]
  %s6 = inlined_call_operand.hbm [shape: f32[128,128], index: 6, kind: input, shape index: {}]
  %s7 = inlined_call_operand.hbm [shape: f32[128,128], index: 7, kind: input, shape index: {}]
  %s8 = inlined_call_operand.vmem [shape: f32[1,128], index: 8, kind: input, shape index: {}]
  %s9 = inlined_call_operand.hbm [shape: f32[128,128], index: 9, kind: input, shape index: {}]
  %s10 = inlined_call_operand.hbm [shape: f32[128,128], index: 10, kind: input, shape index: {}]
  %s11 = inlined_call_operand.hbm [shape: f32[128,128], index: 11, kind: input, shape index: {}]
  %s12 = inlined_call_operand.vmem [shape: f32[1,128], index: 12, kind: input, shape index: {}]
  %s13 = inlined_call_operand.hbm [shape: f32[128,128], index: 13, kind: output, shape index: {}]
  %s14 = sld [smem:[#allocation0]]
  $region90: #{tpu_custom_call.1} parent=0
    _
  %s16 = ssub.s32 1, %s14
  %s17 = scalar_select 0, %s16, %s14
  $region1: #{tpu_custom_call.1} parent=0
    #allocation2 [shape = 'u8[65536]{0}', space=vmem, size = 0x10000, scoped, tag = 'input window, operand 4, single buffered']
    #allocation3 [shape = 's32[1]{0}', space=sflag, size = 0x4, scoped, tag = 'scoped memory for tpu_custom_call.1']
    #allocation4 [shape = 's32[1]{0}', space=sflag, size = 0x4, scoped, tag = 'scoped memory for tpu_custom_call.1']
    #allocation5 [shape = 'u8[65536]{0}', space=vmem, size = 0x10000, scoped, tag = 'input window, operand 5, single buffered']
    #allocation6 [shape = 's32[1]{0}', space=sflag, size = 0x4, scoped, tag = 'scoped memory for tpu_custom_call.1']
    #allocation7 [shape = 'u8[65536]{0}', space=vmem, size = 0x10000, scoped, tag = 'input window, operand 6, single buffered']
    #allocation8 [shape = 'u8[65536]{0}', space=vmem, size = 0x10000, scoped, tag = 'input window, operand 7, single buffered']
    #allocation9 [shape = 's32[1]{0}', space=sflag, size = 0x4, scoped, tag = 'scoped memory for tpu_custom_call.1']
    #allocation10 [shape = 'u8[65536]{0}', space=vmem, size = 0x10000, scoped, tag = 'input window, operand 9, single buffered']
    #allocation11 [shape = 'u8[65536]{0}', space=vmem, size = 0x10000, scoped, tag = 'input window, operand 10, single buffered']
    #allocation12 [shape = 's32[1]{0}', space=sflag, size = 0x4, scoped, tag = 'scoped memory for tpu_custom_call.1']
    #allocation13 [shape = 'u8[65536]{0}', space=vmem, size = 0x10000, scoped, tag = 'input window, operand 11, single buffered']
    #allocation14 [shape = 'u8[65536]{0}', space=vmem, size = 0x10000, scoped, tag = 'output window, operand 0, single buffered']
    %18 = vsyncpa [#allocation3], 0
    %19 = vsyncpa [#allocation6], 0
    %20 = vsyncpa [#allocation9], 0
    %21 = vsyncpa [#allocation12], 0
    %22 = vsyncpa [#allocation4], 0
    // Predicated region
    $region2: #{tpu_custom_call.1} parent=1 // pred_check
      _
    $region3: #{tpu_custom_call.1} parent=1 // pred_check_branch
      %24 = sbr.rel (0) target = $region5
    $region4: #{tpu_custom_call.1} parent=1 // pred_region
      _
    $region5: #{tpu_custom_call.1} parent=1 // pred_fallthru
      _
    // Predicated region
    $region6: #{tpu_custom_call.1} parent=1 // pred_check
      _
    $region7: #{tpu_custom_call.1} parent=1 // pred_check_branch
      %26 = sbr.rel (0) target = $region9
    $region8: #{tpu_custom_call.1} parent=1 // pred_region
      _
    $region9: #{tpu_custom_call.1} parent=1 // pred_fallthru
      _
    // Predicated region
    $region10: #{tpu_custom_call.1} parent=1 // pred_check
      _
    $region11: #{tpu_custom_call.1} parent=1 // pred_check_branch
      %28 = sbr.rel (0) target = $region13
    $region12: #{tpu_custom_call.1} parent=1 // pred_region
      _
    $region13: #{tpu_custom_call.1} parent=1 // pred_fallthru
      _
    // Predicated region
    $region14: #{tpu_custom_call.1} parent=1 // pred_check
      _
    $region15: #{tpu_custom_call.1} parent=1 // pred_check_branch
      %30 = sbr.rel (0) target = $region17
    $region16: #{tpu_custom_call.1} parent=1 // pred_region
      _
    $region17: #{tpu_custom_call.1} parent=1 // pred_fallthru
      _
    // Predicated region
    $region18: #{tpu_custom_call.1} parent=1 // pred_check
      _
    $region19: #{tpu_custom_call.1} parent=1 // pred_check_branch
      %32 = sbr.rel (0) target = $region21
    $region20: #{tpu_custom_call.1} parent=1 // pred_region
      %s34 = ssub.s32 2048, 2048
      %35 = vsyncadd [#allocation3], %s34
      %s36 = sshll.u32 [#allocation2], 4
      %s37 = int_to_ptr.vmem [resolvable:$true] %s36
      %42 = dma.hbm_to_vmem [thread:$0]  %s4, 2048, %s37, [#allocation3], 128, 128, 8
    $region21: #{tpu_custom_call.1} parent=1 // pred_fallthru
      _
    // Predicated region
    $region22: #{tpu_custom_call.1} parent=1 // pred_check
      _
    $region23: #{tpu_custom_call.1} parent=1 // pred_check_branch
      %44 = sbr.rel (0) target = $region25
    $region24: #{tpu_custom_call.1} parent=1 // pred_region
      %s46 = ssub.s32 2048, 2048
      %47 = vsyncadd [#allocation6], %s46
      %s48 = sshll.u32 [#allocation5], 4
      %s49 = int_to_ptr.vmem [resolvable:$true] %s48
      %54 = dma.hbm_to_vmem [thread:$0]  %s5, 2048, %s49, [#allocation6], 128, 128, 8
    $region25: #{tpu_custom_call.1} parent=1 // pred_fallthru
      _
    // Predicated region
    $region26: #{tpu_custom_call.1} parent=1 // pred_check
      _
    $region27: #{tpu_custom_call.1} parent=1 // pred_check_branch
      %56 = sbr.rel (0) target = $region29
    $region28: #{tpu_custom_call.1} parent=1 // pred_region
      %s58 = ssub.s32 2048, 2048
      %59 = vsyncadd [#allocation6], %s58
      %s60 = sshll.u32 [#allocation7], 4
      %s61 = int_to_ptr.vmem [resolvable:$true] %s60
      %66 = dma.hbm_to_vmem [thread:$0]  %s6, 2048, %s61, [#allocation6], 128, 128, 8
    $region29: #{tpu_custom_call.1} parent=1 // pred_fallthru
      _
    // Predicated region
    $region30: #{tpu_custom_call.1} parent=1 // pred_check
      _
    $region31: #{tpu_custom_call.1} parent=1 // pred_check_branch
      %68 = sbr.rel (0) target = $region33
    $region32: #{tpu_custom_call.1} parent=1 // pred_region
      %s70 = ssub.s32 2048, 2048
      %71 = vsyncadd [#allocation9], %s70
      %s72 = sshll.u32 [#allocation8], 4
      %s73 = int_to_ptr.vmem [resolvable:$true] %s72
      %78 = dma.hbm_to_vmem [thread:$0]  %s7, 2048, %s73, [#allocation9], 128, 128, 8
    $region33: #{tpu_custom_call.1} parent=1 // pred_fallthru
      _
    // Predicated region
    $region34: #{tpu_custom_call.1} parent=1 // pred_check
      _
    $region35: #{tpu_custom_call.1} parent=1 // pred_check_branch
      %80 = sbr.rel (0) target = $region37
    $region36: #{tpu_custom_call.1} parent=1 // pred_region
      _
    $region37: #{tpu_custom_call.1} parent=1 // pred_fallthru
      _
    // Predicated region
    $region38: #{tpu_custom_call.1} parent=1 // pred_check
      _
    $region39: #{tpu_custom_call.1} parent=1 // pred_check_branch
      %82 = sbr.rel (0) target = $region41
    $region40: #{tpu_custom_call.1} parent=1 // pred_region
      %s84 = ssub.s32 2048, 2048
      %85 = vsyncadd [#allocation9], %s84
      %s86 = sshll.u32 [#allocation10], 4
      %s87 = int_to_ptr.vmem [resolvable:$true] %s86
      %92 = dma.hbm_to_vmem [thread:$0]  %s9, 2048, %s87, [#allocation9], 128, 128, 8
    $region41: #{tpu_custom_call.1} parent=1 // pred_fallthru
      _
    // Predicated region
    $region42: #{tpu_custom_call.1} parent=1 // pred_check
      _
    $region43: #{tpu_custom_call.1} parent=1 // pred_check_branch
      %94 = sbr.rel (0) target = $region45
    $region44: #{tpu_custom_call.1} parent=1 // pred_region
      %s96 = ssub.s32 2048, 2048
      %97 = vsyncadd [#allocation12], %s96
      %s98 = sshll.u32 [#allocation11], 4
      %s99 = int_to_ptr.vmem [resolvable:$true] %s98
      %104 = dma.hbm_to_vmem [thread:$0]  %s10, 2048, %s99, [#allocation12], 128, 128, 8
    $region45: #{tpu_custom_call.1} parent=1 // pred_fallthru
      _
    // Predicated region
    $region46: #{tpu_custom_call.1} parent=1 // pred_check
      _
    $region47: #{tpu_custom_call.1} parent=1 // pred_check_branch
      %106 = sbr.rel (0) target = $region49
    $region48: #{tpu_custom_call.1} parent=1 // pred_region
      %s108 = ssub.s32 2048, 2048
      %109 = vsyncadd [#allocation12], %s108
      %s110 = sshll.u32 [#allocation13], 4
      %s111 = int_to_ptr.vmem [resolvable:$true] %s110
      %116 = dma.hbm_to_vmem [thread:$0]  %s11, 2048, %s111, [#allocation12], 128, 128, 8
    $region49: #{tpu_custom_call.1} parent=1 // pred_fallthru
      _
    // Predicated region
    $region50: #{tpu_custom_call.1} parent=1 // pred_check
      _
    $region51: #{tpu_custom_call.1} parent=1 // pred_check_branch
      %118 = sbr.rel (0) target = $region53
    $region52: #{tpu_custom_call.1} parent=1 // pred_region
      _
    $region53: #{tpu_custom_call.1} parent=1 // pred_fallthru
      _
    // Predicated region
    $region54: #{tpu_custom_call.1} parent=1 // pred_check
      _
    $region55: #{tpu_custom_call.1} parent=1 // pred_check_branch
      %120 = sbr.rel (0) target = $region57
    $region56: #{tpu_custom_call.1} parent=1 // pred_region
      %121 = dma.done [#allocation3], 2048
    $region57: #{tpu_custom_call.1} parent=1 // pred_fallthru
      _
    // Predicated region
    $region58: #{tpu_custom_call.1} parent=1 // pred_check
      _
    $region59: #{tpu_custom_call.1} parent=1 // pred_check_branch
      %123 = sbr.rel (0) target = $region61
    $region60: #{tpu_custom_call.1} parent=1 // pred_region
      %124 = dma.done [#allocation6], 2048
    $region61: #{tpu_custom_call.1} parent=1 // pred_fallthru
      _
    // Predicated region
    $region62: #{tpu_custom_call.1} parent=1 // pred_check
      _
    $region63: #{tpu_custom_call.1} parent=1 // pred_check_branch
      %126 = sbr.rel (0) target = $region65
    $region64: #{tpu_custom_call.1} parent=1 // pred_region
      %127 = dma.done [#allocation6], 2048
    $region65: #{tpu_custom_call.1} parent=1 // pred_fallthru
      _
    // Predicated region
    $region66: #{tpu_custom_call.1} parent=1 // pred_check
      _
    $region67: #{tpu_custom_call.1} parent=1 // pred_check_branch
      %129 = sbr.rel (0) target = $region69
    $region68: #{tpu_custom_call.1} parent=1 // pred_region
      %130 = dma.done [#allocation9], 2048
    $region69: #{tpu_custom_call.1} parent=1 // pred_fallthru
      _
    // Predicated region
    $region70: #{tpu_custom_call.1} parent=1 // pred_check
      _
    $region71: #{tpu_custom_call.1} parent=1 // pred_check_branch
      %132 = sbr.rel (0) target = $region73
    $region72: #{tpu_custom_call.1} parent=1 // pred_region
      %133 = dma.done [#allocation9], 2048
    $region73: #{tpu_custom_call.1} parent=1 // pred_fallthru
      _
    // Predicated region
    $region74: #{tpu_custom_call.1} parent=1 // pred_check
      _
    $region75: #{tpu_custom_call.1} parent=1 // pred_check_branch
      %135 = sbr.rel (0) target = $region77
    $region76: #{tpu_custom_call.1} parent=1 // pred_region
      %136 = dma.done [#allocation12], 2048
    $region77: #{tpu_custom_call.1} parent=1 // pred_fallthru
      _
    // Predicated region
    $region78: #{tpu_custom_call.1} parent=1 // pred_check
      _
    $region79: #{tpu_custom_call.1} parent=1 // pred_check_branch
      %138 = sbr.rel (0) target = $region81
    $region80: #{tpu_custom_call.1} parent=1 // pred_region
      %139 = dma.done [#allocation12], 2048
    $region81: #{tpu_custom_call.1} parent=1 // pred_fallthru
      _
    %v140 = vld [vmem:[%s0] sm:$0xff]
    %v141 = vld [vmem:[%s0 + $0x8] sm:$0xff]
    %v142 = vld [vmem:[%s0 + $0x10] sm:$0xff]
    %v143 = vld [vmem:[%s0 + $0x18] sm:$0xff]
    %v144 = vld [vmem:[%s0 + $0x20] sm:$0xff]
    %v145 = vld [vmem:[%s0 + $0x28] sm:$0xff]
    %v146 = vld [vmem:[%s0 + $0x30] sm:$0xff]
    %v147 = vld [vmem:[%s0 + $0x38] sm:$0xff]
    %v148 = vld [vmem:[%s0 + $0x40] sm:$0xff]
    %v149 = vld [vmem:[%s0 + $0x48] sm:$0xff]
    %v150 = vld [vmem:[%s0 + $0x50] sm:$0xff]
    %v151 = vld [vmem:[%s0 + $0x58] sm:$0xff]
    %v152 = vld [vmem:[%s0 + $0x60] sm:$0xff]
    %v153 = vld [vmem:[%s0 + $0x68] sm:$0xff]
    %v154 = vld [vmem:[%s0 + $0x70] sm:$0xff]
    %v155 = vld [vmem:[%s0 + $0x78] sm:$0xff]
    %v156 = vld [vmem:[%s1] sm:$0xff]
    %v157 = vld [vmem:[%s1 + $0x8] sm:$0xff]
    %v158 = vld [vmem:[%s1 + $0x10] sm:$0xff]
    %v159 = vld [vmem:[%s1 + $0x18] sm:$0xff]
    %v160 = vld [vmem:[%s1 + $0x20] sm:$0xff]
    %v161 = vld [vmem:[%s1 + $0x28] sm:$0xff]
    %v162 = vld [vmem:[%s1 + $0x30] sm:$0xff]
    %v163 = vld [vmem:[%s1 + $0x38] sm:$0xff]
    %v164 = vld [vmem:[%s1 + $0x40] sm:$0xff]
    %v165 = vld [vmem:[%s1 + $0x48] sm:$0xff]
    %v166 = vld [vmem:[%s1 + $0x50] sm:$0xff]
    %v167 = vld [vmem:[%s1 + $0x58] sm:$0xff]
    %v168 = vld [vmem:[%s1 + $0x60] sm:$0xff]
    %v169 = vld [vmem:[%s1 + $0x68] sm:$0xff]
    %v170 = vld [vmem:[%s1 + $0x70] sm:$0xff]
    %v171 = vld [vmem:[%s1 + $0x78] sm:$0xff]
    %v172 = vld [vmem:[%s2] sm:$0xff]
    %v173 = vld [vmem:[%s2 + $0x8] sm:$0xff]
    %v174 = vld [vmem:[%s2 + $0x10] sm:$0xff]
    %v175 = vld [vmem:[%s2 + $0x18] sm:$0xff]
    %v176 = vld [vmem:[%s2 + $0x20] sm:$0xff]
    %v177 = vld [vmem:[%s2 + $0x28] sm:$0xff]
    %v178 = vld [vmem:[%s2 + $0x30] sm:$0xff]
    %v179 = vld [vmem:[%s2 + $0x38] sm:$0xff]
    %v180 = vld [vmem:[%s2 + $0x40] sm:$0xff]
    %v181 = vld [vmem:[%s2 + $0x48] sm:$0xff]
    %v182 = vld [vmem:[%s2 + $0x50] sm:$0xff]
    %v183 = vld [vmem:[%s2 + $0x58] sm:$0xff]
    %v184 = vld [vmem:[%s2 + $0x60] sm:$0xff]
    %v185 = vld [vmem:[%s2 + $0x68] sm:$0xff]
    %v186 = vld [vmem:[%s2 + $0x70] sm:$0xff]
    %v187 = vld [vmem:[%s2 + $0x78] sm:$0xff]
    %v188 = vld [vmem:[%s3] sm:$0xff]
    %v189 = vld [vmem:[%s3 + $0x8] sm:$0xff]
    %v190 = vld [vmem:[%s3 + $0x10] sm:$0xff]
    %v191 = vld [vmem:[%s3 + $0x18] sm:$0xff]
    %v192 = vld [vmem:[%s3 + $0x20] sm:$0xff]
    %v193 = vld [vmem:[%s3 + $0x28] sm:$0xff]
    %v194 = vld [vmem:[%s3 + $0x30] sm:$0xff]
    %v195 = vld [vmem:[%s3 + $0x38] sm:$0xff]
    %v196 = vld [vmem:[%s3 + $0x40] sm:$0xff]
    %v197 = vld [vmem:[%s3 + $0x48] sm:$0xff]
    %v198 = vld [vmem:[%s3 + $0x50] sm:$0xff]
    %v199 = vld [vmem:[%s3 + $0x58] sm:$0xff]
    %v200 = vld [vmem:[%s3 + $0x60] sm:$0xff]
    %v201 = vld [vmem:[%s3 + $0x68] sm:$0xff]
    %v202 = vld [vmem:[%s3 + $0x70] sm:$0xff]
    %v203 = vld [vmem:[%s3 + $0x78] sm:$0xff]
    %v204 = vld [vmem:[#allocation2] sm:$0xff]
    %v205 = vld [vmem:[#allocation2 + $0x8] sm:$0xff]
    %v206 = vld [vmem:[#allocation2 + $0x10] sm:$0xff]
    %v207 = vld [vmem:[#allocation2 + $0x18] sm:$0xff]
    %v208 = vld [vmem:[#allocation2 + $0x20] sm:$0xff]
    %v209 = vld [vmem:[#allocation2 + $0x28] sm:$0xff]
    %v210 = vld [vmem:[#allocation2 + $0x30] sm:$0xff]
    %v211 = vld [vmem:[#allocation2 + $0x38] sm:$0xff]
    %v212 = vld [vmem:[#allocation2 + $0x40] sm:$0xff]
    %v213 = vld [vmem:[#allocation2 + $0x48] sm:$0xff]
    %v214 = vld [vmem:[#allocation2 + $0x50] sm:$0xff]
    %v215 = vld [vmem:[#allocation2 + $0x58] sm:$0xff]
    %v216 = vld [vmem:[#allocation2 + $0x60] sm:$0xff]
    %v217 = vld [vmem:[#allocation2 + $0x68] sm:$0xff]
    %v218 = vld [vmem:[#allocation2 + $0x70] sm:$0xff]
    %v219 = vld [vmem:[#allocation2 + $0x78] sm:$0xff]
    %v220 = vld [vmem:[#allocation5] sm:$0xff]
    %v221 = vld [vmem:[#allocation5 + $0x8] sm:$0xff]
    %v222 = vld [vmem:[#allocation5 + $0x10] sm:$0xff]
    %v223 = vld [vmem:[#allocation5 + $0x18] sm:$0xff]
    %v224 = vld [vmem:[#allocation5 + $0x20] sm:$0xff]
    %v225 = vld [vmem:[#allocation5 + $0x28] sm:$0xff]
    %v226 = vld [vmem:[#allocation5 + $0x30] sm:$0xff]
    %v227 = vld [vmem:[#allocation5 + $0x38] sm:$0xff]
    %v228 = vld [vmem:[#allocation5 + $0x40] sm:$0xff]
    %v229 = vld [vmem:[#allocation5 + $0x48] sm:$0xff]
    %v230 = vld [vmem:[#allocation5 + $0x50] sm:$0xff]
    %v231 = vld [vmem:[#allocation5 + $0x58] sm:$0xff]
    %v232 = vld [vmem:[#allocation5 + $0x60] sm:$0xff]
    %v233 = vld [vmem:[#allocation5 + $0x68] sm:$0xff]
    %v234 = vld [vmem:[#allocation5 + $0x70] sm:$0xff]
    %v235 = vld [vmem:[#allocation5 + $0x78] sm:$0xff]
    %v236 = vld [vmem:[#allocation7] sm:$0xff]
    %v237 = vld [vmem:[#allocation7 + $0x8] sm:$0xff]
    %v238 = vld [vmem:[#allocation7 + $0x10] sm:$0xff]
    %v239 = vld [vmem:[#allocation7 + $0x18] sm:$0xff]
    %v240 = vld [vmem:[#allocation7 + $0x20] sm:$0xff]
    %v241 = vld [vmem:[#allocation7 + $0x28] sm:$0xff]
    %v242 = vld [vmem:[#allocation7 + $0x30] sm:$0xff]
    %v243 = vld [vmem:[#allocation7 + $0x38] sm:$0xff]
    %v244 = vld [vmem:[#allocation7 + $0x40] sm:$0xff]
    %v245 = vld [vmem:[#allocation7 + $0x48] sm:$0xff]
    %v246 = vld [vmem:[#allocation7 + $0x50] sm:$0xff]
    %v247 = vld [vmem:[#allocation7 + $0x58] sm:$0xff]
    %v248 = vld [vmem:[#allocation7 + $0x60] sm:$0xff]
    %v249 = vld [vmem:[#allocation7 + $0x68] sm:$0xff]
    %v250 = vld [vmem:[#allocation7 + $0x70] sm:$0xff]
    %v251 = vld [vmem:[#allocation7 + $0x78] sm:$0xff]
    %v252 = vld [vmem:[#allocation8] sm:$0xff]
    %v253 = vld [vmem:[#allocation8 + $0x8] sm:$0xff]
    %v254 = vld [vmem:[#allocation8 + $0x10] sm:$0xff]
    %v255 = vld [vmem:[#allocation8 + $0x18] sm:$0xff]
    %v256 = vld [vmem:[#allocation8 + $0x20] sm:$0xff]
    %v257 = vld [vmem:[#allocation8 + $0x28] sm:$0xff]
    %v258 = vld [vmem:[#allocation8 + $0x30] sm:$0xff]
    %v259 = vld [vmem:[#allocation8 + $0x38] sm:$0xff]
    %v260 = vld [vmem:[#allocation8 + $0x40] sm:$0xff]
    %v261 = vld [vmem:[#allocation8 + $0x48] sm:$0xff]
    %v262 = vld [vmem:[#allocation8 + $0x50] sm:$0xff]
    %v263 = vld [vmem:[#allocation8 + $0x58] sm:$0xff]
    %v264 = vld [vmem:[#allocation8 + $0x60] sm:$0xff]
    %v265 = vld [vmem:[#allocation8 + $0x68] sm:$0xff]
    %v266 = vld [vmem:[#allocation8 + $0x70] sm:$0xff]
    %v267 = vld [vmem:[#allocation8 + $0x78] sm:$0xff]
    %v268 = vld [vmem:[%s8] sm:$0x1]
    %269 = vmatprep.subr.mxu0 0.0
    %270 = vmatpush1.msra.mxu0 %v204
    %271 = vmatprep.subr.mxu0 0.0
    %272 = vmatpush1.msra.mxu0 %v205
    %273 = vmatprep.subr.mxu0 0.0
    %274 = vmatpush1.msra.mxu0 %v206
    %275 = vmatprep.subr.mxu0 0.0
    %276 = vmatpush1.msra.mxu0 %v207
    %277 = vmatprep.subr.mxu0 0.0
    %278 = vmatpush1.msra.mxu0 %v208
    %279 = vmatprep.subr.mxu0 0.0
    %280 = vmatpush1.msra.mxu0 %v209
    %281 = vmatprep.subr.mxu0 0.0
    %282 = vmatpush1.msra.mxu0 %v210
    %283 = vmatprep.subr.mxu0 0.0
    %284 = vmatpush1.msra.mxu0 %v211
    %285 = vmatprep.subr.mxu0 0.0
    %286 = vmatpush1.msra.mxu0 %v212
    %287 = vmatprep.subr.mxu0 0.0
    %288 = vmatpush1.msra.mxu0 %v213
    %289 = vmatprep.subr.mxu0 0.0
    %290 = vmatpush1.msra.mxu0 %v214
    %291 = vmatprep.subr.mxu0 0.0
    %292 = vmatpush1.msra.mxu0 %v215
    %293 = vmatprep.subr.mxu0 0.0
    %294 = vmatpush1.msra.mxu0 %v216
    %295 = vmatprep.subr.mxu0 0.0
    %296 = vmatpush1.msra.mxu0 %v217
    %297 = vmatprep.subr.mxu0 0.0
    %298 = vmatpush1.msra.mxu0 %v218
    %299 = vmatprep.subr.mxu0 0.0
    %300 = vmatpush1.msra.mxu0 %v219
    %301 = vmatprep.subr.mxu0 0.0
    %302 = vmatpush1.msra.mxu0 0.0
    %303 = vmatprep.subr.mxu0 0.0
    %304 = vmatpush1.msra.mxu0 0.0
    %305 = vmatprep.subr.mxu0 0.0
    %306 = vmatpush1.msra.mxu0 0.0
    %307 = vmatprep.subr.mxu0 0.0
    %308 = vmatpush1.msra.mxu0 0.0
    %309 = vmatprep.subr.mxu0 0.0
    %310 = vmatpush1.msra.mxu0 0.0
    %311 = vmatprep.subr.mxu0 0.0
    %312 = vmatpush1.msra.mxu0 0.0
    %313 = vmatprep.subr.mxu0 0.0
    %314 = vmatpush1.msra.mxu0 0.0
    %315 = vmatprep.subr.mxu0 0.0
    %316 = vmatpush1.msra.mxu0 0.0
    %317 = vmatprep.subr.mxu0 0.0
    %318 = vmatpush1.msra.mxu0 0.0
    %319 = vmatprep.subr.mxu0 0.0
    %320 = vmatpush1.msra.mxu0 0.0
    %321 = vmatprep.subr.mxu0 0.0
    %322 = vmatpush1.msra.mxu0 0.0
    %323 = vmatprep.subr.mxu0 0.0
    %324 = vmatpush1.msra.mxu0 0.0
    %325 = vmatprep.subr.mxu0 0.0
    %326 = vmatpush1.msra.mxu0 0.0
    %327 = vmatprep.subr.mxu0 0.0
    %328 = vmatpush1.msra.mxu0 0.0
    %329 = vmatprep.subr.mxu0 0.0
    %330 = vmatpush1.msra.mxu0 0.0
    %331 = vmatprep.subr.mxu0 0.0
    %332 = vmatpush1.msra.mxu0 0.0
    %333 = vmatprep.mubr.f32.mxu0 0.0
    %334 = vmatmul.mubr.f32.gmra.mrb[0].mxu0 %v140
    %v335 = vpop.f32.mrb[0].mxu0
    %v336 = vadd.f32 0.0, %v335
    %v337 = vpop.f32.mrb[0].mxu0
    %338 = vmatprep.mubr.f32.mxu0 0.0
    %339 = vmatmul.mubr.f32.gmra.mrb[0].mxu0 %v141
    %v340 = vpop.f32.mrb[0].mxu0
    %v341 = vadd.f32 0.0, %v340
    %v342 = vpop.f32.mrb[0].mxu0
    %343 = vmatprep.mubr.f32.mxu0 0.0
    %344 = vmatmul.mubr.f32.gmra.mrb[0].mxu0 %v142
    %v345 = vpop.f32.mrb[0].mxu0
    %v346 = vadd.f32 0.0, %v345
    %v347 = vpop.f32.mrb[0].mxu0
    %348 = vmatprep.mubr.f32.mxu0 0.0
    %349 = vmatmul.mubr.f32.gmra.mrb[0].mxu0 %v143
    %v350 = vpop.f32.mrb[0].mxu0
    %v351 = vadd.f32 0.0, %v350
    %v352 = vpop.f32.mrb[0].mxu0
    %353 = vmatprep.mubr.f32.mxu0 0.0
    %354 = vmatmul.mubr.f32.gmra.mrb[0].mxu0 %v144
    %v355 = vpop.f32.mrb[0].mxu0
    %v356 = vadd.f32 0.0, %v355
    %v357 = vpop.f32.mrb[0].mxu0
    %358 = vmatprep.mubr.f32.mxu0 0.0
    %359 = vmatmul.mubr.f32.gmra.mrb[0].mxu0 %v145
    %v360 = vpop.f32.mrb[0].mxu0
    %v361 = vadd.f32 0.0, %v360
    %v362 = vpop.f32.mrb[0].mxu0
    %363 = vmatprep.mubr.f32.mxu0 0.0
    %364 = vmatmul.mubr.f32.gmra.mrb[0].mxu0 %v146
    %v365 = vpop.f32.mrb[0].mxu0
    %v366 = vadd.f32 0.0, %v365
    %v367 = vpop.f32.mrb[0].mxu0
    %368 = vmatprep.mubr.f32.mxu0 0.0
    %369 = vmatmul.mubr.f32.gmra.mrb[0].mxu0 %v147
    %v370 = vpop.f32.mrb[0].mxu0
    %v371 = vadd.f32 0.0, %v370
    %v372 = vpop.f32.mrb[0].mxu0
    %373 = vmatprep.mubr.f32.mxu0 0.0
    %374 = vmatmul.mubr.f32.gmra.mrb[0].mxu0 %v148
    %v375 = vpop.f32.mrb[0].mxu0
    %v376 = vadd.f32 0.0, %v375
    %v377 = vpop.f32.mrb[0].mxu0
    %378 = vmatprep.mubr.f32.mxu0 0.0
    %379 = vmatmul.mubr.f32.gmra.mrb[0].mxu0 %v149
    %v380 = vpop.f32.mrb[0].mxu0
    %v381 = vadd.f32 0.0, %v380
    %v382 = vpop.f32.mrb[0].mxu0
    %383 = vmatprep.mubr.f32.mxu0 0.0
    %384 = vmatmul.mubr.f32.gmra.mrb[0].mxu0 %v150
    %v385 = vpop.f32.mrb[0].mxu0
    %v386 = vadd.f32 0.0, %v385
    %v387 = vpop.f32.mrb[0].mxu0
    %388 = vmatprep.mubr.f32.mxu0 0.0
    %389 = vmatmul.mubr.f32.gmra.mrb[0].mxu0 %v151
    %v390 = vpop.f32.mrb[0].mxu0
    %v391 = vadd.f32 0.0, %v390
    %v392 = vpop.f32.mrb[0].mxu0
    %393 = vmatprep.mubr.f32.mxu0 0.0
    %394 = vmatmul.mubr.f32.gmra.mrb[0].mxu0 %v152
    %v395 = vpop.f32.mrb[0].mxu0
    %v396 = vadd.f32 0.0, %v395
    %v397 = vpop.f32.mrb[0].mxu0
    %398 = vmatprep.mubr.f32.mxu0 0.0
    %399 = vmatmul.mubr.f32.gmra.mrb[0].mxu0 %v153
    %v400 = vpop.f32.mrb[0].mxu0
    %v401 = vadd.f32 0.0, %v400
    %v402 = vpop.f32.mrb[0].mxu0
    %403 = vmatprep.mubr.f32.mxu0 0.0
    %404 = vmatmul.mubr.f32.gmra.mrb[0].mxu0 %v154
    %v405 = vpop.f32.mrb[0].mxu0
    %v406 = vadd.f32 0.0, %v405
    %v407 = vpop.f32.mrb[0].mxu0
    %408 = vmatprep.mubr.f32.mxu0 0.0
    %409 = vmatmul.mubr.f32.gmra.mrb[0].mxu0 %v155
    %v410 = vpop.f32.mrb[0].mxu0
    %v411 = vadd.f32 0.0, %v410
    %v412 = vpop.f32.mrb[0].mxu0
    %413 = vdwg.mxu0
    %415 = vset.pattern.permute.xlu0 0
    %416 = vperm.xlu0 %415, %v172
    %v417 = vpop.permute.xlu0 %416
    %420 = vset.pattern.permute.xlu0 0
    %421 = vperm.xlu0 %420, %v173
    %v422 = vpop.permute.xlu0 %421
    %425 = vset.pattern.permute.xlu0 0
    %426 = vperm.xlu0 %425, %v174
    %v427 = vpop.permute.xlu0 %426
    %430 = vset.pattern.permute.xlu0 0
    %431 = vperm.xlu0 %430, %v175
    %v432 = vpop.permute.xlu0 %431
    %435 = vset.pattern.permute.xlu0 0
    %436 = vperm.xlu0 %435, %v176
    %v437 = vpop.permute.xlu0 %436
    %440 = vset.pattern.permute.xlu0 0
    %441 = vperm.xlu0 %440, %v177
    %v442 = vpop.permute.xlu0 %441
    %445 = vset.pattern.permute.xlu0 0
    %446 = vperm.xlu0 %445, %v178
    %v447 = vpop.permute.xlu0 %446
    %450 = vset.pattern.permute.xlu0 0
    %451 = vperm.xlu0 %450, %v179
    %v452 = vpop.permute.xlu0 %451
    %455 = vset.pattern.permute.xlu0 0
    %456 = vperm.xlu0 %455, %v180
    %v457 = vpop.permute.xlu0 %456
    %460 = vset.pattern.permute.xlu0 0
    %461 = vperm.xlu0 %460, %v181
    %v462 = vpop.permute.xlu0 %461
    %465 = vset.pattern.permute.xlu0 0
    %466 = vperm.xlu0 %465, %v182
    %v467 = vpop.permute.xlu0 %466
    %470 = vset.pattern.permute.xlu0 0
    %471 = vperm.xlu0 %470, %v183
    %v472 = vpop.permute.xlu0 %471
    %475 = vset.pattern.permute.xlu0 0
    %476 = vperm.xlu0 %475, %v184
    %v477 = vpop.permute.xlu0 %476
    %480 = vset.pattern.permute.xlu0 0
    %481 = vperm.xlu0 %480, %v185
    %v482 = vpop.permute.xlu0 %481
    %485 = vset.pattern.permute.xlu0 0
    %486 = vperm.xlu0 %485, %v186
    %v487 = vpop.permute.xlu0 %486
    %490 = vset.pattern.permute.xlu0 0
    %491 = vperm.xlu0 %490, %v187
    %v492 = vpop.permute.xlu0 %491
    %v494 = vmul.f32 %v336, %v417
    %v495 = vmul.f32 %v341, %v422
    %v496 = vmul.f32 %v346, %v427
    %v497 = vmul.f32 %v351, %v432
    %v498 = vmul.f32 %v356, %v437
    %v499 = vmul.f32 %v361, %v442
    %v500 = vmul.f32 %v366, %v447
    %v501 = vmul.f32 %v371, %v452
    %v502 = vmul.f32 %v376, %v457
    %v503 = vmul.f32 %v381, %v462
    %v504 = vmul.f32 %v386, %v467
    %v505 = vmul.f32 %v391, %v472
    %v506 = vmul.f32 %v396, %v477
    %v507 = vmul.f32 %v401, %v482
    %v508 = vmul.f32 %v406, %v487
    %v509 = vmul.f32 %v411, %v492
    %510 = vmatprep.subr.mxu0 0.0
    %511 = vmatpush1.msra.mxu0 %v204
    %512 = vmatprep.subr.mxu0 0.0
    %513 = vmatpush1.msra.mxu0 %v205
    %514 = vmatprep.subr.mxu0 0.0
    %515 = vmatpush1.msra.mxu0 %v206
    %516 = vmatprep.subr.mxu0 0.0
    %517 = vmatpush1.msra.mxu0 %v207
    %518 = vmatprep.subr.mxu0 0.0
    %519 = vmatpush1.msra.mxu0 %v208
    %520 = vmatprep.subr.mxu0 0.0
    %521 = vmatpush1.msra.mxu0 %v209
    %522 = vmatprep.subr.mxu0 0.0
    %523 = vmatpush1.msra.mxu0 %v210
    %524 = vmatprep.subr.mxu0 0.0
    %525 = vmatpush1.msra.mxu0 %v211
    %526 = vmatprep.subr.mxu0 0.0
    %527 = vmatpush1.msra.mxu0 %v212
    %528 = vmatprep.subr.mxu0 0.0
    %529 = vmatpush1.msra.mxu0 %v213
    %530 = vmatprep.subr.mxu0 0.0
    %531 = vmatpush1.msra.mxu0 %v214
    %532 = vmatprep.subr.mxu0 0.0
    %533 = vmatpush1.msra.mxu0 %v215
    %534 = vmatprep.subr.mxu0 0.0
    %535 = vmatpush1.msra.mxu0 %v216
    %536 = vmatprep.subr.mxu0 0.0
    %537 = vmatpush1.msra.mxu0 %v217
    %538 = vmatprep.subr.mxu0 0.0
    %539 = vmatpush1.msra.mxu0 %v218
    %540 = vmatprep.subr.mxu0 0.0
    %541 = vmatpush1.msra.mxu0 %v219
    %542 = vmatprep.subr.mxu0 0.0
    %543 = vmatpush1.msra.mxu0 0.0
    %544 = vmatprep.subr.mxu0 0.0
    %545 = vmatpush1.msra.mxu0 0.0
    %546 = vmatprep.subr.mxu0 0.0
    %547 = vmatpush1.msra.mxu0 0.0
    %548 = vmatprep.subr.mxu0 0.0
    %549 = vmatpush1.msra.mxu0 0.0
    %550 = vmatprep.subr.mxu0 0.0
    %551 = vmatpush1.msra.mxu0 0.0
    %552 = vmatprep.subr.mxu0 0.0
    %553 = vmatpush1.msra.mxu0 0.0
    %554 = vmatprep.subr.mxu0 0.0
    %555 = vmatpush1.msra.mxu0 0.0
    %556 = vmatprep.subr.mxu0 0.0
    %557 = vmatpush1.msra.mxu0 0.0
    %558 = vmatprep.subr.mxu0 0.0
    %559 = vmatpush1.msra.mxu0 0.0
    %560 = vmatprep.subr.mxu0 0.0
    %561 = vmatpush1.msra.mxu0 0.0
    %562 = vmatprep.subr.mxu0 0.0
    %563 = vmatpush1.msra.mxu0 0.0
    %564 = vmatprep.subr.mxu0 0.0
    %565 = vmatpush1.msra.mxu0 0.0
    %566 = vmatprep.subr.mxu0 0.0
    %567 = vmatpush1.msra.mxu0 0.0
    %568 = vmatprep.subr.mxu0 0.0
    %569 = vmatpush1.msra.mxu0 0.0
    %570 = vmatprep.subr.mxu0 0.0
    %571 = vmatpush1.msra.mxu0 0.0
    %572 = vmatprep.subr.mxu0 0.0
    %573 = vmatpush1.msra.mxu0 0.0
    %574 = vmatprep.mubr.f32.mxu0 0.0
    %575 = vmatmul.mubr.f32.gmra.mrb[0].mxu0 %v156
    %v576 = vpop.f32.mrb[0].mxu0
    %v577 = vadd.f32 0.0, %v576
    %v578 = vpop.f32.mrb[0].mxu0
    %579 = vmatprep.mubr.f32.mxu0 0.0
    %580 = vmatmul.mubr.f32.gmra.mrb[0].mxu0 %v157
    %v581 = vpop.f32.mrb[0].mxu0
    %v582 = vadd.f32 0.0, %v581
    %v583 = vpop.f32.mrb[0].mxu0
    %584 = vmatprep.mubr.f32.mxu0 0.0
    %585 = vmatmul.mubr.f32.gmra.mrb[0].mxu0 %v158
    %v586 = vpop.f32.mrb[0].mxu0
    %v587 = vadd.f32 0.0, %v586
    %v588 = vpop.f32.mrb[0].mxu0
    %589 = vmatprep.mubr.f32.mxu0 0.0
    %590 = vmatmul.mubr.f32.gmra.mrb[0].mxu0 %v159
    %v591 = vpop.f32.mrb[0].mxu0
    %v592 = vadd.f32 0.0, %v591
    %v593 = vpop.f32.mrb[0].mxu0
    %594 = vmatprep.mubr.f32.mxu0 0.0
    %595 = vmatmul.mubr.f32.gmra.mrb[0].mxu0 %v160
    %v596 = vpop.f32.mrb[0].mxu0
    %v597 = vadd.f32 0.0, %v596
    %v598 = vpop.f32.mrb[0].mxu0
    %599 = vmatprep.mubr.f32.mxu0 0.0
    %600 = vmatmul.mubr.f32.gmra.mrb[0].mxu0 %v161
    %v601 = vpop.f32.mrb[0].mxu0
    %v602 = vadd.f32 0.0, %v601
    %v603 = vpop.f32.mrb[0].mxu0
    %604 = vmatprep.mubr.f32.mxu0 0.0
    %605 = vmatmul.mubr.f32.gmra.mrb[0].mxu0 %v162
    %v606 = vpop.f32.mrb[0].mxu0
    %v607 = vadd.f32 0.0, %v606
    %v608 = vpop.f32.mrb[0].mxu0
    %609 = vmatprep.mubr.f32.mxu0 0.0
    %610 = vmatmul.mubr.f32.gmra.mrb[0].mxu0 %v163
    %v611 = vpop.f32.mrb[0].mxu0
    %v612 = vadd.f32 0.0, %v611
    %v613 = vpop.f32.mrb[0].mxu0
    %614 = vmatprep.mubr.f32.mxu0 0.0
    %615 = vmatmul.mubr.f32.gmra.mrb[0].mxu0 %v164
    %v616 = vpop.f32.mrb[0].mxu0
    %v617 = vadd.f32 0.0, %v616
    %v618 = vpop.f32.mrb[0].mxu0
    %619 = vmatprep.mubr.f32.mxu0 0.0
    %620 = vmatmul.mubr.f32.gmra.mrb[0].mxu0 %v165
    %v621 = vpop.f32.mrb[0].mxu0
    %v622 = vadd.f32 0.0, %v621
    %v623 = vpop.f32.mrb[0].mxu0
    %624 = vmatprep.mubr.f32.mxu0 0.0
    %625 = vmatmul.mubr.f32.gmra.mrb[0].mxu0 %v166
    %v626 = vpop.f32.mrb[0].mxu0
    %v627 = vadd.f32 0.0, %v626
    %v628 = vpop.f32.mrb[0].mxu0
    %629 = vmatprep.mubr.f32.mxu0 0.0
    %630 = vmatmul.mubr.f32.gmra.mrb[0].mxu0 %v167
    %v631 = vpop.f32.mrb[0].mxu0
    %v632 = vadd.f32 0.0, %v631
    %v633 = vpop.f32.mrb[0].mxu0
    %634 = vmatprep.mubr.f32.mxu0 0.0
    %635 = vmatmul.mubr.f32.gmra.mrb[0].mxu0 %v168
    %v636 = vpop.f32.mrb[0].mxu0
    %v637 = vadd.f32 0.0, %v636
    %v638 = vpop.f32.mrb[0].mxu0
    %639 = vmatprep.mubr.f32.mxu0 0.0
    %640 = vmatmul.mubr.f32.gmra.mrb[0].mxu0 %v169
    %v641 = vpop.f32.mrb[0].mxu0
    %v642 = vadd.f32 0.0, %v641
    %v643 = vpop.f32.mrb[0].mxu0
    %644 = vmatprep.mubr.f32.mxu0 0.0
    %645 = vmatmul.mubr.f32.gmra.mrb[0].mxu0 %v170
    %v646 = vpop.f32.mrb[0].mxu0
    %v647 = vadd.f32 0.0, %v646
    %v648 = vpop.f32.mrb[0].mxu0
    %649 = vmatprep.mubr.f32.mxu0 0.0
    %650 = vmatmul.mubr.f32.gmra.mrb[0].mxu0 %v171
    %v651 = vpop.f32.mrb[0].mxu0
    %v652 = vadd.f32 0.0, %v651
    %v653 = vpop.f32.mrb[0].mxu0
    %654 = vdwg.mxu0
    %656 = vset.pattern.permute.xlu0 0
    %657 = vperm.xlu0 %656, %v188
    %v658 = vpop.permute.xlu0 %657
    %661 = vset.pattern.permute.xlu0 0
    %662 = vperm.xlu0 %661, %v189
    %v663 = vpop.permute.xlu0 %662
    %666 = vset.pattern.permute.xlu0 0
    %667 = vperm.xlu0 %666, %v190
    %v668 = vpop.permute.xlu0 %667
    %671 = vset.pattern.permute.xlu0 0
    %672 = vperm.xlu0 %671, %v191
    %v673 = vpop.permute.xlu0 %672
    %676 = vset.pattern.permute.xlu0 0
    %677 = vperm.xlu0 %676, %v192
    %v678 = vpop.permute.xlu0 %677
    %681 = vset.pattern.permute.xlu0 0
    %682 = vperm.xlu0 %681, %v193
    %v683 = vpop.permute.xlu0 %682
    %686 = vset.pattern.permute.xlu0 0
    %687 = vperm.xlu0 %686, %v194
    %v688 = vpop.permute.xlu0 %687
    %691 = vset.pattern.permute.xlu0 0
    %692 = vperm.xlu0 %691, %v195
    %v693 = vpop.permute.xlu0 %692
    %696 = vset.pattern.permute.xlu0 0
    %697 = vperm.xlu0 %696, %v196
    %v698 = vpop.permute.xlu0 %697
    %701 = vset.pattern.permute.xlu0 0
    %702 = vperm.xlu0 %701, %v197
    %v703 = vpop.permute.xlu0 %702
    %706 = vset.pattern.permute.xlu0 0
    %707 = vperm.xlu0 %706, %v198
    %v708 = vpop.permute.xlu0 %707
    %711 = vset.pattern.permute.xlu0 0
    %712 = vperm.xlu0 %711, %v199
    %v713 = vpop.permute.xlu0 %712
    %716 = vset.pattern.permute.xlu0 0
    %717 = vperm.xlu0 %716, %v200
    %v718 = vpop.permute.xlu0 %717
    %721 = vset.pattern.permute.xlu0 0
    %722 = vperm.xlu0 %721, %v201
    %v723 = vpop.permute.xlu0 %722
    %726 = vset.pattern.permute.xlu0 0
    %727 = vperm.xlu0 %726, %v202
    %v728 = vpop.permute.xlu0 %727
    %731 = vset.pattern.permute.xlu0 0
    %732 = vperm.xlu0 %731, %v203
    %v733 = vpop.permute.xlu0 %732
    %v735 = vmul.f32 %v577, %v658
    %v736 = vmul.f32 %v582, %v663
    %v737 = vmul.f32 %v587, %v668
    %v738 = vmul.f32 %v592, %v673
    %v739 = vmul.f32 %v597, %v678
    %v740 = vmul.f32 %v602, %v683
    %v741 = vmul.f32 %v607, %v688
    %v742 = vmul.f32 %v612, %v693
    %v743 = vmul.f32 %v617, %v698
    %v744 = vmul.f32 %v622, %v703
    %v745 = vmul.f32 %v627, %v708
    %v746 = vmul.f32 %v632, %v713
    %v747 = vmul.f32 %v637, %v718
    %v748 = vmul.f32 %v642, %v723
    %v749 = vmul.f32 %v647, %v728
    %v750 = vmul.f32 %v652, %v733
    %751 = vmatprep.subr.mxu0 0.0
    %752 = vmatpush1.msra.mxu0 %v236
    %753 = vmatprep.subr.mxu0 0.0
    %754 = vmatpush1.msra.mxu0 %v237
    %755 = vmatprep.subr.mxu0 0.0
    %756 = vmatpush1.msra.mxu0 %v238
    %757 = vmatprep.subr.mxu0 0.0
    %758 = vmatpush1.msra.mxu0 %v239
    %759 = vmatprep.subr.mxu0 0.0
    %760 = vmatpush1.msra.mxu0 %v240
    %761 = vmatprep.subr.mxu0 0.0
    %762 = vmatpush1.msra.mxu0 %v241
    %763 = vmatprep.subr.mxu0 0.0
    %764 = vmatpush1.msra.mxu0 %v242
    %765 = vmatprep.subr.mxu0 0.0
    %766 = vmatpush1.msra.mxu0 %v243
    %767 = vmatprep.subr.mxu0 0.0
    %768 = vmatpush1.msra.mxu0 %v244
    %769 = vmatprep.subr.mxu0 0.0
    %770 = vmatpush1.msra.mxu0 %v245
    %771 = vmatprep.subr.mxu0 0.0
    %772 = vmatpush1.msra.mxu0 %v246
    %773 = vmatprep.subr.mxu0 0.0
    %774 = vmatpush1.msra.mxu0 %v247
    %775 = vmatprep.subr.mxu0 0.0
    %776 = vmatpush1.msra.mxu0 %v248
    %777 = vmatprep.subr.mxu0 0.0
    %778 = vmatpush1.msra.mxu0 %v249
    %779 = vmatprep.subr.mxu0 0.0
    %780 = vmatpush1.msra.mxu0 %v250
    %781 = vmatprep.subr.mxu0 0.0
    %782 = vmatpush1.msra.mxu0 %v251
    %783 = vmatprep.subr.mxu0 0.0
    %784 = vmatpush1.msra.mxu0 0.0
    %785 = vmatprep.subr.mxu0 0.0
    %786 = vmatpush1.msra.mxu0 0.0
    %787 = vmatprep.subr.mxu0 0.0
    %788 = vmatpush1.msra.mxu0 0.0
    %789 = vmatprep.subr.mxu0 0.0
    %790 = vmatpush1.msra.mxu0 0.0
    %791 = vmatprep.subr.mxu0 0.0
    %792 = vmatpush1.msra.mxu0 0.0
    %793 = vmatprep.subr.mxu0 0.0
    %794 = vmatpush1.msra.mxu0 0.0
    %795 = vmatprep.subr.mxu0 0.0
    %796 = vmatpush1.msra.mxu0 0.0
    %797 = vmatprep.subr.mxu0 0.0
    %798 = vmatpush1.msra.mxu0 0.0
    %799 = vmatprep.subr.mxu0 0.0
    %800 = vmatpush1.msra.mxu0 0.0
    %801 = vmatprep.subr.mxu0 0.0
    %802 = vmatpush1.msra.mxu0 0.0
    %803 = vmatprep.subr.mxu0 0.0
    %804 = vmatpush1.msra.mxu0 0.0
    %805 = vmatprep.subr.mxu0 0.0
    %806 = vmatpush1.msra.mxu0 0.0
    %807 = vmatprep.subr.mxu0 0.0
    %808 = vmatpush1.msra.mxu0 0.0
    %809 = vmatprep.subr.mxu0 0.0
    %810 = vmatpush1.msra.mxu0 0.0
    %811 = vmatprep.subr.mxu0 0.0
    %812 = vmatpush1.msra.mxu0 0.0
    %813 = vmatprep.subr.mxu0 0.0
    %814 = vmatpush1.msra.mxu0 0.0
    %815 = vmatprep.mubr.f32.mxu0 0.0
    %816 = vmatmul.mubr.f32.gmra.mrb[0].mxu0 %v735
    %v817 = vpop.f32.mrb[0].mxu0
    %v818 = vadd.f32 0.0, %v817
    %v819 = vpop.f32.mrb[0].mxu0
    %820 = vmatprep.mubr.f32.mxu0 0.0
    %821 = vmatmul.mubr.f32.gmra.mrb[0].mxu0 %v736
    %v822 = vpop.f32.mrb[0].mxu0
    %v823 = vadd.f32 0.0, %v822
    %v824 = vpop.f32.mrb[0].mxu0
    %825 = vmatprep.mubr.f32.mxu0 0.0
    %826 = vmatmul.mubr.f32.gmra.mrb[0].mxu0 %v737
    %v827 = vpop.f32.mrb[0].mxu0
    %v828 = vadd.f32 0.0, %v827
    %v829 = vpop.f32.mrb[0].mxu0
    %830 = vmatprep.mubr.f32.mxu0 0.0
    %831 = vmatmul.mubr.f32.gmra.mrb[0].mxu0 %v738
    %v832 = vpop.f32.mrb[0].mxu0
    %v833 = vadd.f32 0.0, %v832
    %v834 = vpop.f32.mrb[0].mxu0
    %835 = vmatprep.mubr.f32.mxu0 0.0
    %836 = vmatmul.mubr.f32.gmra.mrb[0].mxu0 %v739
    %v837 = vpop.f32.mrb[0].mxu0
    %v838 = vadd.f32 0.0, %v837
    %v839 = vpop.f32.mrb[0].mxu0
    %840 = vmatprep.mubr.f32.mxu0 0.0
    %841 = vmatmul.mubr.f32.gmra.mrb[0].mxu0 %v740
    %v842 = vpop.f32.mrb[0].mxu0
    %v843 = vadd.f32 0.0, %v842
    %v844 = vpop.f32.mrb[0].mxu0
    %845 = vmatprep.mubr.f32.mxu0 0.0
    %846 = vmatmul.mubr.f32.gmra.mrb[0].mxu0 %v741
    %v847 = vpop.f32.mrb[0].mxu0
    %v848 = vadd.f32 0.0, %v847
    %v849 = vpop.f32.mrb[0].mxu0
    %850 = vmatprep.mubr.f32.mxu0 0.0
    %851 = vmatmul.mubr.f32.gmra.mrb[0].mxu0 %v742
    %v852 = vpop.f32.mrb[0].mxu0
    %v853 = vadd.f32 0.0, %v852
    %v854 = vpop.f32.mrb[0].mxu0
    %855 = vmatprep.mubr.f32.mxu0 0.0
    %856 = vmatmul.mubr.f32.gmra.mrb[0].mxu0 %v743
    %v857 = vpop.f32.mrb[0].mxu0
    %v858 = vadd.f32 0.0, %v857
    %v859 = vpop.f32.mrb[0].mxu0
    %860 = vmatprep.mubr.f32.mxu0 0.0
    %861 = vmatmul.mubr.f32.gmra.mrb[0].mxu0 %v744
    %v862 = vpop.f32.mrb[0].mxu0
    %v863 = vadd.f32 0.0, %v862
    %v864 = vpop.f32.mrb[0].mxu0
    %865 = vmatprep.mubr.f32.mxu0 0.0
    %866 = vmatmul.mubr.f32.gmra.mrb[0].mxu0 %v745
    %v867 = vpop.f32.mrb[0].mxu0
    %v868 = vadd.f32 0.0, %v867
    %v869 = vpop.f32.mrb[0].mxu0
    %870 = vmatprep.mubr.f32.mxu0 0.0
    %871 = vmatmul.mubr.f32.gmra.mrb[0].mxu0 %v746
    %v872 = vpop.f32.mrb[0].mxu0
    %v873 = vadd.f32 0.0, %v872
    %v874 = vpop.f32.mrb[0].mxu0
    %875 = vmatprep.mubr.f32.mxu0 0.0
    %876 = vmatmul.mubr.f32.gmra.mrb[0].mxu0 %v747
    %v877 = vpop.f32.mrb[0].mxu0
    %v878 = vadd.f32 0.0, %v877
    %v879 = vpop.f32.mrb[0].mxu0
    %880 = vmatprep.mubr.f32.mxu0 0.0
    %881 = vmatmul.mubr.f32.gmra.mrb[0].mxu0 %v748
    %v882 = vpop.f32.mrb[0].mxu0
    %v883 = vadd.f32 0.0, %v882
    %v884 = vpop.f32.mrb[0].mxu0
    %885 = vmatprep.mubr.f32.mxu0 0.0
    %886 = vmatmul.mubr.f32.gmra.mrb[0].mxu0 %v749
    %v887 = vpop.f32.mrb[0].mxu0
    %v888 = vadd.f32 0.0, %v887
    %v889 = vpop.f32.mrb[0].mxu0
    %890 = vmatprep.mubr.f32.mxu0 0.0
    %891 = vmatmul.mubr.f32.gmra.mrb[0].mxu0 %v750
    %v892 = vpop.f32.mrb[0].mxu0
    %v893 = vadd.f32 0.0, %v892
    %v894 = vpop.f32.mrb[0].mxu0
    %895 = vdwg.mxu0
    %896 = vmatprep.subr.mxu0 0.0
    %897 = vmatpush1.msra.mxu0 %v220
    %898 = vmatprep.subr.mxu0 0.0
    %899 = vmatpush1.msra.mxu0 %v221
    %900 = vmatprep.subr.mxu0 0.0
    %901 = vmatpush1.msra.mxu0 %v222
    %902 = vmatprep.subr.mxu0 0.0
    %903 = vmatpush1.msra.mxu0 %v223
    %904 = vmatprep.subr.mxu0 0.0
    %905 = vmatpush1.msra.mxu0 %v224
    %906 = vmatprep.subr.mxu0 0.0
    %907 = vmatpush1.msra.mxu0 %v225
    %908 = vmatprep.subr.mxu0 0.0
    %909 = vmatpush1.msra.mxu0 %v226
    %910 = vmatprep.subr.mxu0 0.0
    %911 = vmatpush1.msra.mxu0 %v227
    %912 = vmatprep.subr.mxu0 0.0
    %913 = vmatpush1.msra.mxu0 %v228
    %914 = vmatprep.subr.mxu0 0.0
    %915 = vmatpush1.msra.mxu0 %v229
    %916 = vmatprep.subr.mxu0 0.0
    %917 = vmatpush1.msra.mxu0 %v230
    %918 = vmatprep.subr.mxu0 0.0
    %919 = vmatpush1.msra.mxu0 %v231
    %920 = vmatprep.subr.mxu0 0.0
    %921 = vmatpush1.msra.mxu0 %v232
    %922 = vmatprep.subr.mxu0 0.0
    %923 = vmatpush1.msra.mxu0 %v233
    %924 = vmatprep.subr.mxu0 0.0
    %925 = vmatpush1.msra.mxu0 %v234
    %926 = vmatprep.subr.mxu0 0.0
    %927 = vmatpush1.msra.mxu0 %v235
    %928 = vmatprep.subr.mxu0 0.0
    %929 = vmatpush1.msra.mxu0 0.0
    %930 = vmatprep.subr.mxu0 0.0
    %931 = vmatpush1.msra.mxu0 0.0
    %932 = vmatprep.subr.mxu0 0.0
    %933 = vmatpush1.msra.mxu0 0.0
    %934 = vmatprep.subr.mxu0 0.0
    %935 = vmatpush1.msra.mxu0 0.0
    %936 = vmatprep.subr.mxu0 0.0
    %937 = vmatpush1.msra.mxu0 0.0
    %938 = vmatprep.subr.mxu0 0.0
    %939 = vmatpush1.msra.mxu0 0.0
    %940 = vmatprep.subr.mxu0 0.0
    %941 = vmatpush1.msra.mxu0 0.0
    %942 = vmatprep.subr.mxu0 0.0
    %943 = vmatpush1.msra.mxu0 0.0
    %944 = vmatprep.subr.mxu0 0.0
    %945 = vmatpush1.msra.mxu0 0.0
    %946 = vmatprep.subr.mxu0 0.0
    %947 = vmatpush1.msra.mxu0 0.0
    %948 = vmatprep.subr.mxu0 0.0
    %949 = vmatpush1.msra.mxu0 0.0
    %950 = vmatprep.subr.mxu0 0.0
    %951 = vmatpush1.msra.mxu0 0.0
    %952 = vmatprep.subr.mxu0 0.0
    %953 = vmatpush1.msra.mxu0 0.0
    %954 = vmatprep.subr.mxu0 0.0
    %955 = vmatpush1.msra.mxu0 0.0
    %956 = vmatprep.subr.mxu0 0.0
    %957 = vmatpush1.msra.mxu0 0.0
    %958 = vmatprep.subr.mxu0 0.0
    %959 = vmatpush1.msra.mxu0 0.0
    %960 = vmatprep.mubr.f32.mxu0 0.0
    %961 = vmatmul.mubr.f32.gmra.mrb[0].mxu0 %v494
    %v962 = vpop.f32.mrb[0].mxu0
    %v963 = vadd.f32 %v818, %v962
    %v964 = vpop.f32.mrb[0].mxu0
    %965 = vmatprep.mubr.f32.mxu0 0.0
    %966 = vmatmul.mubr.f32.gmra.mrb[0].mxu0 %v495
    %v967 = vpop.f32.mrb[0].mxu0
    %v968 = vadd.f32 %v823, %v967
    %v969 = vpop.f32.mrb[0].mxu0
    %970 = vmatprep.mubr.f32.mxu0 0.0
    %971 = vmatmul.mubr.f32.gmra.mrb[0].mxu0 %v496
    %v972 = vpop.f32.mrb[0].mxu0
    %v973 = vadd.f32 %v828, %v972
    %v974 = vpop.f32.mrb[0].mxu0
    %975 = vmatprep.mubr.f32.mxu0 0.0
    %976 = vmatmul.mubr.f32.gmra.mrb[0].mxu0 %v497
    %v977 = vpop.f32.mrb[0].mxu0
    %v978 = vadd.f32 %v833, %v977
    %v979 = vpop.f32.mrb[0].mxu0
    %980 = vmatprep.mubr.f32.mxu0 0.0
    %981 = vmatmul.mubr.f32.gmra.mrb[0].mxu0 %v498
    %v982 = vpop.f32.mrb[0].mxu0
    %v983 = vadd.f32 %v838, %v982
    %v984 = vpop.f32.mrb[0].mxu0
    %985 = vmatprep.mubr.f32.mxu0 0.0
    %986 = vmatmul.mubr.f32.gmra.mrb[0].mxu0 %v499
    %v987 = vpop.f32.mrb[0].mxu0
    %v988 = vadd.f32 %v843, %v987
    %v989 = vpop.f32.mrb[0].mxu0
    %990 = vmatprep.mubr.f32.mxu0 0.0
    %991 = vmatmul.mubr.f32.gmra.mrb[0].mxu0 %v500
    %v992 = vpop.f32.mrb[0].mxu0
    %v993 = vadd.f32 %v848, %v992
    %v994 = vpop.f32.mrb[0].mxu0
    %995 = vmatprep.mubr.f32.mxu0 0.0
    %996 = vmatmul.mubr.f32.gmra.mrb[0].mxu0 %v501
    %v997 = vpop.f32.mrb[0].mxu0
    %v998 = vadd.f32 %v853, %v997
    %v999 = vpop.f32.mrb[0].mxu0
    %1000 = vmatprep.mubr.f32.mxu0 0.0
    %1001 = vmatmul.mubr.f32.gmra.mrb[0].mxu0 %v502
    %v1002 = vpop.f32.mrb[0].mxu0
    %v1003 = vadd.f32 %v858, %v1002
    %v1004 = vpop.f32.mrb[0].mxu0
    %1005 = vmatprep.mubr.f32.mxu0 0.0
    %1006 = vmatmul.mubr.f32.gmra.mrb[0].mxu0 %v503
    %v1007 = vpop.f32.mrb[0].mxu0
    %v1008 = vadd.f32 %v863, %v1007
    %v1009 = vpop.f32.mrb[0].mxu0
    %1010 = vmatprep.mubr.f32.mxu0 0.0
    %1011 = vmatmul.mubr.f32.gmra.mrb[0].mxu0 %v504
    %v1012 = vpop.f32.mrb[0].mxu0
    %v1013 = vadd.f32 %v868, %v1012
    %v1014 = vpop.f32.mrb[0].mxu0
    %1015 = vmatprep.mubr.f32.mxu0 0.0
    %1016 = vmatmul.mubr.f32.gmra.mrb[0].mxu0 %v505
    %v1017 = vpop.f32.mrb[0].mxu0
    %v1018 = vadd.f32 %v873, %v1017
    %v1019 = vpop.f32.mrb[0].mxu0
    %1020 = vmatprep.mubr.f32.mxu0 0.0
    %1021 = vmatmul.mubr.f32.gmra.mrb[0].mxu0 %v506
    %v1022 = vpop.f32.mrb[0].mxu0
    %v1023 = vadd.f32 %v878, %v1022
    %v1024 = vpop.f32.mrb[0].mxu0
    %1025 = vmatprep.mubr.f32.mxu0 0.0
    %1026 = vmatmul.mubr.f32.gmra.mrb[0].mxu0 %v507
    %v1027 = vpop.f32.mrb[0].mxu0
    %v1028 = vadd.f32 %v883, %v1027
    %v1029 = vpop.f32.mrb[0].mxu0
    %1030 = vmatprep.mubr.f32.mxu0 0.0
    %1031 = vmatmul.mubr.f32.gmra.mrb[0].mxu0 %v508
    %v1032 = vpop.f32.mrb[0].mxu0
    %v1033 = vadd.f32 %v888, %v1032
    %v1034 = vpop.f32.mrb[0].mxu0
    %1035 = vmatprep.mubr.f32.mxu0 0.0
    %1036 = vmatmul.mubr.f32.gmra.mrb[0].mxu0 %v509
    %v1037 = vpop.f32.mrb[0].mxu0
    %v1038 = vadd.f32 %v893, %v1037
    %v1039 = vpop.f32.mrb[0].mxu0
    %1040 = vdwg.mxu0
    %1041 = vmatprep.subr.mxu0 0.0
    %1042 = vmatpush1.msra.mxu0 %v252
    %1043 = vmatprep.subr.mxu0 0.0
    %1044 = vmatpush1.msra.mxu0 %v253
    %1045 = vmatprep.subr.mxu0 0.0
    %1046 = vmatpush1.msra.mxu0 %v254
    %1047 = vmatprep.subr.mxu0 0.0
    %1048 = vmatpush1.msra.mxu0 %v255
    %1049 = vmatprep.subr.mxu0 0.0
    %1050 = vmatpush1.msra.mxu0 %v256
    %1051 = vmatprep.subr.mxu0 0.0
    %1052 = vmatpush1.msra.mxu0 %v257
    %1053 = vmatprep.subr.mxu0 0.0
    %1054 = vmatpush1.msra.mxu0 %v258
    %1055 = vmatprep.subr.mxu0 0.0
    %1056 = vmatpush1.msra.mxu0 %v259
    %1057 = vmatprep.subr.mxu0 0.0
    %1058 = vmatpush1.msra.mxu0 %v260
    %1059 = vmatprep.subr.mxu0 0.0
    %1060 = vmatpush1.msra.mxu0 %v261
    %1061 = vmatprep.subr.mxu0 0.0
    %1062 = vmatpush1.msra.mxu0 %v262
    %1063 = vmatprep.subr.mxu0 0.0
    %1064 = vmatpush1.msra.mxu0 %v263
    %1065 = vmatprep.subr.mxu0 0.0
    %1066 = vmatpush1.msra.mxu0 %v264
    %1067 = vmatprep.subr.mxu0 0.0
    %1068 = vmatpush1.msra.mxu0 %v265
    %1069 = vmatprep.subr.mxu0 0.0
    %1070 = vmatpush1.msra.mxu0 %v266
    %1071 = vmatprep.subr.mxu0 0.0
    %1072 = vmatpush1.msra.mxu0 %v267
    %1073 = vmatprep.subr.mxu0 0.0
    %1074 = vmatpush1.msra.mxu0 0.0
    %1075 = vmatprep.subr.mxu0 0.0
    %1076 = vmatpush1.msra.mxu0 0.0
    %1077 = vmatprep.subr.mxu0 0.0
    %1078 = vmatpush1.msra.mxu0 0.0
    %1079 = vmatprep.subr.mxu0 0.0
    %1080 = vmatpush1.msra.mxu0 0.0
    %1081 = vmatprep.subr.mxu0 0.0
    %1082 = vmatpush1.msra.mxu0 0.0
    %1083 = vmatprep.subr.mxu0 0.0
    %1084 = vmatpush1.msra.mxu0 0.0
    %1085 = vmatprep.subr.mxu0 0.0
    %1086 = vmatpush1.msra.mxu0 0.0
    %1087 = vmatprep.subr.mxu0 0.0
    %1088 = vmatpush1.msra.mxu0 0.0
    %1089 = vmatprep.subr.mxu0 0.0
    %1090 = vmatpush1.msra.mxu0 0.0
    %1091 = vmatprep.subr.mxu0 0.0
    %1092 = vmatpush1.msra.mxu0 0.0
    %1093 = vmatprep.subr.mxu0 0.0
    %1094 = vmatpush1.msra.mxu0 0.0
    %1095 = vmatprep.subr.mxu0 0.0
    %1096 = vmatpush1.msra.mxu0 0.0
    %1097 = vmatprep.subr.mxu0 0.0
    %1098 = vmatpush1.msra.mxu0 0.0
    %1099 = vmatprep.subr.mxu0 0.0
    %1100 = vmatpush1.msra.mxu0 0.0
    %1101 = vmatprep.subr.mxu0 0.0
    %1102 = vmatpush1.msra.mxu0 0.0
    %1103 = vmatprep.subr.mxu0 0.0
    %1104 = vmatpush1.msra.mxu0 0.0
    %1105 = vmatprep.mubr.f32.mxu0 0.0
    %1106 = vmatmul.mubr.f32.gmra.mrb[0].mxu0 %v204
    %v1107 = vpop.f32.mrb[0].mxu0
    %v1108 = vadd.f32 0.0, %v1107
    %v1109 = vpop.f32.mrb[0].mxu0
    %1110 = vmatprep.mubr.f32.mxu0 0.0
    %1111 = vmatmul.mubr.f32.gmra.mrb[0].mxu0 %v205
    %v1112 = vpop.f32.mrb[0].mxu0
    %v1113 = vadd.f32 0.0, %v1112
    %v1114 = vpop.f32.mrb[0].mxu0
    %1115 = vmatprep.mubr.f32.mxu0 0.0
    %1116 = vmatmul.mubr.f32.gmra.mrb[0].mxu0 %v206
    %v1117 = vpop.f32.mrb[0].mxu0
    %v1118 = vadd.f32 0.0, %v1117
    %v1119 = vpop.f32.mrb[0].mxu0
    %1120 = vmatprep.mubr.f32.mxu0 0.0
    %1121 = vmatmul.mubr.f32.gmra.mrb[0].mxu0 %v207
    %v1122 = vpop.f32.mrb[0].mxu0
    %v1123 = vadd.f32 0.0, %v1122
    %v1124 = vpop.f32.mrb[0].mxu0
    %1125 = vmatprep.mubr.f32.mxu0 0.0
    %1126 = vmatmul.mubr.f32.gmra.mrb[0].mxu0 %v208
    %v1127 = vpop.f32.mrb[0].mxu0
    %v1128 = vadd.f32 0.0, %v1127
    %v1129 = vpop.f32.mrb[0].mxu0
    %1130 = vmatprep.mubr.f32.mxu0 0.0
    %1131 = vmatmul.mubr.f32.gmra.mrb[0].mxu0 %v209
    %v1132 = vpop.f32.mrb[0].mxu0
    %v1133 = vadd.f32 0.0, %v1132
    %v1134 = vpop.f32.mrb[0].mxu0
    %1135 = vmatprep.mubr.f32.mxu0 0.0
    %1136 = vmatmul.mubr.f32.gmra.mrb[0].mxu0 %v210
    %v1137 = vpop.f32.mrb[0].mxu0
    %v1138 = vadd.f32 0.0, %v1137
    %v1139 = vpop.f32.mrb[0].mxu0
    %1140 = vmatprep.mubr.f32.mxu0 0.0
    %1141 = vmatmul.mubr.f32.gmra.mrb[0].mxu0 %v211
    %v1142 = vpop.f32.mrb[0].mxu0
    %v1143 = vadd.f32 0.0, %v1142
    %v1144 = vpop.f32.mrb[0].mxu0
    %1145 = vmatprep.mubr.f32.mxu0 0.0
    %1146 = vmatmul.mubr.f32.gmra.mrb[0].mxu0 %v212
    %v1147 = vpop.f32.mrb[0].mxu0
    %v1148 = vadd.f32 0.0, %v1147
    %v1149 = vpop.f32.mrb[0].mxu0
    %1150 = vmatprep.mubr.f32.mxu0 0.0
    %1151 = vmatmul.mubr.f32.gmra.mrb[0].mxu0 %v213
    %v1152 = vpop.f32.mrb[0].mxu0
    %v1153 = vadd.f32 0.0, %v1152
    %v1154 = vpop.f32.mrb[0].mxu0
    %1155 = vmatprep.mubr.f32.mxu0 0.0
    %1156 = vmatmul.mubr.f32.gmra.mrb[0].mxu0 %v214
    %v1157 = vpop.f32.mrb[0].mxu0
    %v1158 = vadd.f32 0.0, %v1157
    %v1159 = vpop.f32.mrb[0].mxu0
    %1160 = vmatprep.mubr.f32.mxu0 0.0
    %1161 = vmatmul.mubr.f32.gmra.mrb[0].mxu0 %v215
    %v1162 = vpop.f32.mrb[0].mxu0
    %v1163 = vadd.f32 0.0, %v1162
    %v1164 = vpop.f32.mrb[0].mxu0
    %1165 = vmatprep.mubr.f32.mxu0 0.0
    %1166 = vmatmul.mubr.f32.gmra.mrb[0].mxu0 %v216
    %v1167 = vpop.f32.mrb[0].mxu0
    %v1168 = vadd.f32 0.0, %v1167
    %v1169 = vpop.f32.mrb[0].mxu0
    %1170 = vmatprep.mubr.f32.mxu0 0.0
    %1171 = vmatmul.mubr.f32.gmra.mrb[0].mxu0 %v217
    %v1172 = vpop.f32.mrb[0].mxu0
    %v1173 = vadd.f32 0.0, %v1172
    %v1174 = vpop.f32.mrb[0].mxu0
    %1175 = vmatprep.mubr.f32.mxu0 0.0
    %1176 = vmatmul.mubr.f32.gmra.mrb[0].mxu0 %v218
    %v1177 = vpop.f32.mrb[0].mxu0
    %v1178 = vadd.f32 0.0, %v1177
    %v1179 = vpop.f32.mrb[0].mxu0
    %1180 = vmatprep.mubr.f32.mxu0 0.0
    %1181 = vmatmul.mubr.f32.gmra.mrb[0].mxu0 %v219
    %v1182 = vpop.f32.mrb[0].mxu0
    %v1183 = vadd.f32 0.0, %v1182
    %v1184 = vpop.f32.mrb[0].mxu0
    %1185 = vdwg.mxu0
    %v1186 = vadd.f32 %v963, %v1108
    %v1187 = vadd.f32 %v968, %v1113
    %v1188 = vadd.f32 %v973, %v1118
    %v1189 = vadd.f32 %v978, %v1123
    %v1190 = vadd.f32 %v983, %v1128
    %v1191 = vadd.f32 %v988, %v1133
    %v1192 = vadd.f32 %v993, %v1138
    %v1193 = vadd.f32 %v998, %v1143
    %v1194 = vadd.f32 %v1003, %v1148
    %v1195 = vadd.f32 %v1008, %v1153
    %v1196 = vadd.f32 %v1013, %v1158
    %v1197 = vadd.f32 %v1018, %v1163
    %v1198 = vadd.f32 %v1023, %v1168
    %v1199 = vadd.f32 %v1028, %v1173
    %v1200 = vadd.f32 %v1033, %v1178
    %v1201 = vadd.f32 %v1038, %v1183
    %v1203 = vlaneseq
    %v1204 = vshrl.u32 %v1203, 7
    %v1205 = vsub.s32 0, %v1204
    %v1206 = vrot.slane %v268, %v1205
    %v1208 = vadd.f32 %v1186, %v1206
    %v1209 = vadd.f32 %v1187, %v1206
    %v1210 = vadd.f32 %v1188, %v1206
    %v1211 = vadd.f32 %v1189, %v1206
    %v1212 = vadd.f32 %v1190, %v1206
    %v1213 = vadd.f32 %v1191, %v1206
    %v1214 = vadd.f32 %v1192, %v1206
    %v1215 = vadd.f32 %v1193, %v1206
    %v1216 = vadd.f32 %v1194, %v1206
    %v1217 = vadd.f32 %v1195, %v1206
    %v1218 = vadd.f32 %v1196, %v1206
    %v1219 = vadd.f32 %v1197, %v1206
    %v1220 = vadd.f32 %v1198, %v1206
    %v1221 = vadd.f32 %v1199, %v1206
    %v1222 = vadd.f32 %v1200, %v1206
    %v1223 = vadd.f32 %v1201, %v1206
    %v1224 = vtanh.pop %v1208
    %v1225 = vtanh.pop %v1209
    %v1226 = vtanh.pop %v1210
    %v1227 = vtanh.pop %v1211
    %v1228 = vtanh.pop %v1212
    %v1229 = vtanh.pop %v1213
    %v1230 = vtanh.pop %v1214
    %v1231 = vtanh.pop %v1215
    %v1232 = vtanh.pop %v1216
    %v1233 = vtanh.pop %v1217
    %v1234 = vtanh.pop %v1218
    %v1235 = vtanh.pop %v1219
    %v1236 = vtanh.pop %v1220
    %v1237 = vtanh.pop %v1221
    %v1238 = vtanh.pop %v1222
    %v1239 = vtanh.pop %v1223
    %v1240 = vld [vmem:[#allocation10] sm:$0xff]
    %v1241 = vld [vmem:[#allocation10 + $0x8] sm:$0xff]
    %v1242 = vld [vmem:[#allocation10 + $0x10] sm:$0xff]
    %v1243 = vld [vmem:[#allocation10 + $0x18] sm:$0xff]
    %v1244 = vld [vmem:[#allocation10 + $0x20] sm:$0xff]
    %v1245 = vld [vmem:[#allocation10 + $0x28] sm:$0xff]
    %v1246 = vld [vmem:[#allocation10 + $0x30] sm:$0xff]
    %v1247 = vld [vmem:[#allocation10 + $0x38] sm:$0xff]
    %v1248 = vld [vmem:[#allocation10 + $0x40] sm:$0xff]
    %v1249 = vld [vmem:[#allocation10 + $0x48] sm:$0xff]
    %v1250 = vld [vmem:[#allocation10 + $0x50] sm:$0xff]
    %v1251 = vld [vmem:[#allocation10 + $0x58] sm:$0xff]
    %v1252 = vld [vmem:[#allocation10 + $0x60] sm:$0xff]
    %v1253 = vld [vmem:[#allocation10 + $0x68] sm:$0xff]
    %v1254 = vld [vmem:[#allocation10 + $0x70] sm:$0xff]
    %v1255 = vld [vmem:[#allocation10 + $0x78] sm:$0xff]
    %v1256 = vld [vmem:[#allocation11] sm:$0xff]
    %v1257 = vld [vmem:[#allocation11 + $0x8] sm:$0xff]
    %v1258 = vld [vmem:[#allocation11 + $0x10] sm:$0xff]
    %v1259 = vld [vmem:[#allocation11 + $0x18] sm:$0xff]
    %v1260 = vld [vmem:[#allocation11 + $0x20] sm:$0xff]
    %v1261 = vld [vmem:[#allocation11 + $0x28] sm:$0xff]
    %v1262 = vld [vmem:[#allocation11 + $0x30] sm:$0xff]
    %v1263 = vld [vmem:[#allocation11 + $0x38] sm:$0xff]
    %v1264 = vld [vmem:[#allocation11 + $0x40] sm:$0xff]
    %v1265 = vld [vmem:[#allocation11 + $0x48] sm:$0xff]
    %v1266 = vld [vmem:[#allocation11 + $0x50] sm:$0xff]
    %v1267 = vld [vmem:[#allocation11 + $0x58] sm:$0xff]
    %v1268 = vld [vmem:[#allocation11 + $0x60] sm:$0xff]
    %v1269 = vld [vmem:[#allocation11 + $0x68] sm:$0xff]
    %v1270 = vld [vmem:[#allocation11 + $0x70] sm:$0xff]
    %v1271 = vld [vmem:[#allocation11 + $0x78] sm:$0xff]
    %v1272 = vld [vmem:[#allocation13] sm:$0xff]
    %v1273 = vld [vmem:[#allocation13 + $0x8] sm:$0xff]
    %v1274 = vld [vmem:[#allocation13 + $0x10] sm:$0xff]
    %v1275 = vld [vmem:[#allocation13 + $0x18] sm:$0xff]
    %v1276 = vld [vmem:[#allocation13 + $0x20] sm:$0xff]
    %v1277 = vld [vmem:[#allocation13 + $0x28] sm:$0xff]
    %v1278 = vld [vmem:[#allocation13 + $0x30] sm:$0xff]
    %v1279 = vld [vmem:[#allocation13 + $0x38] sm:$0xff]
    %v1280 = vld [vmem:[#allocation13 + $0x40] sm:$0xff]
    %v1281 = vld [vmem:[#allocation13 + $0x48] sm:$0xff]
    %v1282 = vld [vmem:[#allocation13 + $0x50] sm:$0xff]
    %v1283 = vld [vmem:[#allocation13 + $0x58] sm:$0xff]
    %v1284 = vld [vmem:[#allocation13 + $0x60] sm:$0xff]
    %v1285 = vld [vmem:[#allocation13 + $0x68] sm:$0xff]
    %v1286 = vld [vmem:[#allocation13 + $0x70] sm:$0xff]
    %v1287 = vld [vmem:[#allocation13 + $0x78] sm:$0xff]
    %v1288 = vld [vmem:[%s12] sm:$0x1]
    %1289 = vmatprep.subr.mxu0 0.0
    %1290 = vmatpush1.msra.mxu0 %v1224
    %1291 = vmatprep.subr.mxu0 0.0
    %1292 = vmatpush1.msra.mxu0 %v1225
    %1293 = vmatprep.subr.mxu0 0.0
    %1294 = vmatpush1.msra.mxu0 %v1226
    %1295 = vmatprep.subr.mxu0 0.0
    %1296 = vmatpush1.msra.mxu0 %v1227
    %1297 = vmatprep.subr.mxu0 0.0
    %1298 = vmatpush1.msra.mxu0 %v1228
    %1299 = vmatprep.subr.mxu0 0.0
    %1300 = vmatpush1.msra.mxu0 %v1229
    %1301 = vmatprep.subr.mxu0 0.0
    %1302 = vmatpush1.msra.mxu0 %v1230
    %1303 = vmatprep.subr.mxu0 0.0
    %1304 = vmatpush1.msra.mxu0 %v1231
    %1305 = vmatprep.subr.mxu0 0.0
    %1306 = vmatpush1.msra.mxu0 %v1232
    %1307 = vmatprep.subr.mxu0 0.0
    %1308 = vmatpush1.msra.mxu0 %v1233
    %1309 = vmatprep.subr.mxu0 0.0
    %1310 = vmatpush1.msra.mxu0 %v1234
    %1311 = vmatprep.subr.mxu0 0.0
    %1312 = vmatpush1.msra.mxu0 %v1235
    %1313 = vmatprep.subr.mxu0 0.0
    %1314 = vmatpush1.msra.mxu0 %v1236
    %1315 = vmatprep.subr.mxu0 0.0
    %1316 = vmatpush1.msra.mxu0 %v1237
    %1317 = vmatprep.subr.mxu0 0.0
    %1318 = vmatpush1.msra.mxu0 %v1238
    %1319 = vmatprep.subr.mxu0 0.0
    %1320 = vmatpush1.msra.mxu0 %v1239
    %1321 = vmatprep.subr.mxu0 0.0
    %1322 = vmatpush1.msra.mxu0 0.0
    %1323 = vmatprep.subr.mxu0 0.0
    %1324 = vmatpush1.msra.mxu0 0.0
    %1325 = vmatprep.subr.mxu0 0.0
    %1326 = vmatpush1.msra.mxu0 0.0
    %1327 = vmatprep.subr.mxu0 0.0
    %1328 = vmatpush1.msra.mxu0 0.0
    %1329 = vmatprep.subr.mxu0 0.0
    %1330 = vmatpush1.msra.mxu0 0.0
    %1331 = vmatprep.subr.mxu0 0.0
    %1332 = vmatpush1.msra.mxu0 0.0
    %1333 = vmatprep.subr.mxu0 0.0
    %1334 = vmatpush1.msra.mxu0 0.0
    %1335 = vmatprep.subr.mxu0 0.0
    %1336 = vmatpush1.msra.mxu0 0.0
    %1337 = vmatprep.subr.mxu0 0.0
    %1338 = vmatpush1.msra.mxu0 0.0
    %1339 = vmatprep.subr.mxu0 0.0
    %1340 = vmatpush1.msra.mxu0 0.0
    %1341 = vmatprep.subr.mxu0 0.0
    %1342 = vmatpush1.msra.mxu0 0.0
    %1343 = vmatprep.subr.mxu0 0.0
    %1344 = vmatpush1.msra.mxu0 0.0
    %1345 = vmatprep.subr.mxu0 0.0
    %1346 = vmatpush1.msra.mxu0 0.0
    %1347 = vmatprep.subr.mxu0 0.0
    %1348 = vmatpush1.msra.mxu0 0.0
    %1349 = vmatprep.subr.mxu0 0.0
    %1350 = vmatpush1.msra.mxu0 0.0
    %1351 = vmatprep.subr.mxu0 0.0
    %1352 = vmatpush1.msra.mxu0 0.0
    %1353 = vmatprep.mubr.f32.mxu0 0.0
    %1354 = vmatmul.mubr.f32.gmra.mrb[0].mxu0 %v140
    %v1355 = vpop.f32.mrb[0].mxu0
    %v1356 = vadd.f32 0.0, %v1355
    %v1357 = vpop.f32.mrb[0].mxu0
    %1358 = vmatprep.mubr.f32.mxu0 0.0
    %1359 = vmatmul.mubr.f32.gmra.mrb[0].mxu0 %v141
    %v1360 = vpop.f32.mrb[0].mxu0
    %v1361 = vadd.f32 0.0, %v1360
    %v1362 = vpop.f32.mrb[0].mxu0
    %1363 = vmatprep.mubr.f32.mxu0 0.0
    %1364 = vmatmul.mubr.f32.gmra.mrb[0].mxu0 %v142
    %v1365 = vpop.f32.mrb[0].mxu0
    %v1366 = vadd.f32 0.0, %v1365
    %v1367 = vpop.f32.mrb[0].mxu0
    %1368 = vmatprep.mubr.f32.mxu0 0.0
    %1369 = vmatmul.mubr.f32.gmra.mrb[0].mxu0 %v143
    %v1370 = vpop.f32.mrb[0].mxu0
    %v1371 = vadd.f32 0.0, %v1370
    %v1372 = vpop.f32.mrb[0].mxu0
    %1373 = vmatprep.mubr.f32.mxu0 0.0
    %1374 = vmatmul.mubr.f32.gmra.mrb[0].mxu0 %v144
    %v1375 = vpop.f32.mrb[0].mxu0
    %v1376 = vadd.f32 0.0, %v1375
    %v1377 = vpop.f32.mrb[0].mxu0
    %1378 = vmatprep.mubr.f32.mxu0 0.0
    %1379 = vmatmul.mubr.f32.gmra.mrb[0].mxu0 %v145
    %v1380 = vpop.f32.mrb[0].mxu0
    %v1381 = vadd.f32 0.0, %v1380
    %v1382 = vpop.f32.mrb[0].mxu0
    %1383 = vmatprep.mubr.f32.mxu0 0.0
    %1384 = vmatmul.mubr.f32.gmra.mrb[0].mxu0 %v146
    %v1385 = vpop.f32.mrb[0].mxu0
    %v1386 = vadd.f32 0.0, %v1385
    %v1387 = vpop.f32.mrb[0].mxu0
    %1388 = vmatprep.mubr.f32.mxu0 0.0
    %1389 = vmatmul.mubr.f32.gmra.mrb[0].mxu0 %v147
    %v1390 = vpop.f32.mrb[0].mxu0
    %v1391 = vadd.f32 0.0, %v1390
    %v1392 = vpop.f32.mrb[0].mxu0
    %1393 = vmatprep.mubr.f32.mxu0 0.0
    %1394 = vmatmul.mubr.f32.gmra.mrb[0].mxu0 %v148
    %v1395 = vpop.f32.mrb[0].mxu0
    %v1396 = vadd.f32 0.0, %v1395
    %v1397 = vpop.f32.mrb[0].mxu0
    %1398 = vmatprep.mubr.f32.mxu0 0.0
    %1399 = vmatmul.mubr.f32.gmra.mrb[0].mxu0 %v149
    %v1400 = vpop.f32.mrb[0].mxu0
    %v1401 = vadd.f32 0.0, %v1400
    %v1402 = vpop.f32.mrb[0].mxu0
    %1403 = vmatprep.mubr.f32.mxu0 0.0
    %1404 = vmatmul.mubr.f32.gmra.mrb[0].mxu0 %v150
    %v1405 = vpop.f32.mrb[0].mxu0
    %v1406 = vadd.f32 0.0, %v1405
    %v1407 = vpop.f32.mrb[0].mxu0
    %1408 = vmatprep.mubr.f32.mxu0 0.0
    %1409 = vmatmul.mubr.f32.gmra.mrb[0].mxu0 %v151
    %v1410 = vpop.f32.mrb[0].mxu0
    %v1411 = vadd.f32 0.0, %v1410
    %v1412 = vpop.f32.mrb[0].mxu0
    %1413 = vmatprep.mubr.f32.mxu0 0.0
    %1414 = vmatmul.mubr.f32.gmra.mrb[0].mxu0 %v152
    %v1415 = vpop.f32.mrb[0].mxu0
    %v1416 = vadd.f32 0.0, %v1415
    %v1417 = vpop.f32.mrb[0].mxu0
    %1418 = vmatprep.mubr.f32.mxu0 0.0
    %1419 = vmatmul.mubr.f32.gmra.mrb[0].mxu0 %v153
    %v1420 = vpop.f32.mrb[0].mxu0
    %v1421 = vadd.f32 0.0, %v1420
    %v1422 = vpop.f32.mrb[0].mxu0
    %1423 = vmatprep.mubr.f32.mxu0 0.0
    %1424 = vmatmul.mubr.f32.gmra.mrb[0].mxu0 %v154
    %v1425 = vpop.f32.mrb[0].mxu0
    %v1426 = vadd.f32 0.0, %v1425
    %v1427 = vpop.f32.mrb[0].mxu0
    %1428 = vmatprep.mubr.f32.mxu0 0.0
    %1429 = vmatmul.mubr.f32.gmra.mrb[0].mxu0 %v155
    %v1430 = vpop.f32.mrb[0].mxu0
    %v1431 = vadd.f32 0.0, %v1430
    %v1432 = vpop.f32.mrb[0].mxu0
    %1433 = vdwg.mxu0
    %v1434 = vmul.f32 %v1356, %v417
    %v1435 = vmul.f32 %v1361, %v422
    %v1436 = vmul.f32 %v1366, %v427
    %v1437 = vmul.f32 %v1371, %v432
    %v1438 = vmul.f32 %v1376, %v437
    %v1439 = vmul.f32 %v1381, %v442
    %v1440 = vmul.f32 %v1386, %v447
    %v1441 = vmul.f32 %v1391, %v452
    %v1442 = vmul.f32 %v1396, %v457
    %v1443 = vmul.f32 %v1401, %v462
    %v1444 = vmul.f32 %v1406, %v467
    %v1445 = vmul.f32 %v1411, %v472
    %v1446 = vmul.f32 %v1416, %v477
    %v1447 = vmul.f32 %v1421, %v482
    %v1448 = vmul.f32 %v1426, %v487
    %v1449 = vmul.f32 %v1431, %v492
    %1450 = vmatprep.subr.mxu0 0.0
    %1451 = vmatpush1.msra.mxu0 %v1224
    %1452 = vmatprep.subr.mxu0 0.0
    %1453 = vmatpush1.msra.mxu0 %v1225
    %1454 = vmatprep.subr.mxu0 0.0
    %1455 = vmatpush1.msra.mxu0 %v1226
    %1456 = vmatprep.subr.mxu0 0.0
    %1457 = vmatpush1.msra.mxu0 %v1227
    %1458 = vmatprep.subr.mxu0 0.0
    %1459 = vmatpush1.msra.mxu0 %v1228
    %1460 = vmatprep.subr.mxu0 0.0
    %1461 = vmatpush1.msra.mxu0 %v1229
    %1462 = vmatprep.subr.mxu0 0.0
    %1463 = vmatpush1.msra.mxu0 %v1230
    %1464 = vmatprep.subr.mxu0 0.0
    %1465 = vmatpush1.msra.mxu0 %v1231
    %1466 = vmatprep.subr.mxu0 0.0
    %1467 = vmatpush1.msra.mxu0 %v1232
    %1468 = vmatprep.subr.mxu0 0.0
    %1469 = vmatpush1.msra.mxu0 %v1233
    %1470 = vmatprep.subr.mxu0 0.0
    %1471 = vmatpush1.msra.mxu0 %v1234
    %1472 = vmatprep.subr.mxu0 0.0
    %1473 = vmatpush1.msra.mxu0 %v1235
    %1474 = vmatprep.subr.mxu0 0.0
    %1475 = vmatpush1.msra.mxu0 %v1236
    %1476 = vmatprep.subr.mxu0 0.0
    %1477 = vmatpush1.msra.mxu0 %v1237
    %1478 = vmatprep.subr.mxu0 0.0
    %1479 = vmatpush1.msra.mxu0 %v1238
    %1480 = vmatprep.subr.mxu0 0.0
    %1481 = vmatpush1.msra.mxu0 %v1239
    %1482 = vmatprep.subr.mxu0 0.0
    %1483 = vmatpush1.msra.mxu0 0.0
    %1484 = vmatprep.subr.mxu0 0.0
    %1485 = vmatpush1.msra.mxu0 0.0
    %1486 = vmatprep.subr.mxu0 0.0
    %1487 = vmatpush1.msra.mxu0 0.0
    %1488 = vmatprep.subr.mxu0 0.0
    %1489 = vmatpush1.msra.mxu0 0.0
    %1490 = vmatprep.subr.mxu0 0.0
    %1491 = vmatpush1.msra.mxu0 0.0
    %1492 = vmatprep.subr.mxu0 0.0
    %1493 = vmatpush1.msra.mxu0 0.0
    %1494 = vmatprep.subr.mxu0 0.0
    %1495 = vmatpush1.msra.mxu0 0.0
    %1496 = vmatprep.subr.mxu0 0.0
    %1497 = vmatpush1.msra.mxu0 0.0
    %1498 = vmatprep.subr.mxu0 0.0
    %1499 = vmatpush1.msra.mxu0 0.0
    %1500 = vmatprep.subr.mxu0 0.0
    %1501 = vmatpush1.msra.mxu0 0.0
    %1502 = vmatprep.subr.mxu0 0.0
    %1503 = vmatpush1.msra.mxu0 0.0
    %1504 = vmatprep.subr.mxu0 0.0
    %1505 = vmatpush1.msra.mxu0 0.0
    %1506 = vmatprep.subr.mxu0 0.0
    %1507 = vmatpush1.msra.mxu0 0.0
    %1508 = vmatprep.subr.mxu0 0.0
    %1509 = vmatpush1.msra.mxu0 0.0
    %1510 = vmatprep.subr.mxu0 0.0
    %1511 = vmatpush1.msra.mxu0 0.0
    %1512 = vmatprep.subr.mxu0 0.0
    %1513 = vmatpush1.msra.mxu0 0.0
    %1514 = vmatprep.mubr.f32.mxu0 0.0
    %1515 = vmatmul.mubr.f32.gmra.mrb[0].mxu0 %v156
    %v1516 = vpop.f32.mrb[0].mxu0
    %v1517 = vadd.f32 0.0, %v1516
    %v1518 = vpop.f32.mrb[0].mxu0
    %1519 = vmatprep.mubr.f32.mxu0 0.0
    %1520 = vmatmul.mubr.f32.gmra.mrb[0].mxu0 %v157
    %v1521 = vpop.f32.mrb[0].mxu0
    %v1522 = vadd.f32 0.0, %v1521
    %v1523 = vpop.f32.mrb[0].mxu0
    %1524 = vmatprep.mubr.f32.mxu0 0.0
    %1525 = vmatmul.mubr.f32.gmra.mrb[0].mxu0 %v158
    %v1526 = vpop.f32.mrb[0].mxu0
    %v1527 = vadd.f32 0.0, %v1526
    %v1528 = vpop.f32.mrb[0].mxu0
    %1529 = vmatprep.mubr.f32.mxu0 0.0
    %1530 = vmatmul.mubr.f32.gmra.mrb[0].mxu0 %v159
    %v1531 = vpop.f32.mrb[0].mxu0
    %v1532 = vadd.f32 0.0, %v1531
    %v1533 = vpop.f32.mrb[0].mxu0
    %1534 = vmatprep.mubr.f32.mxu0 0.0
    %1535 = vmatmul.mubr.f32.gmra.mrb[0].mxu0 %v160
    %v1536 = vpop.f32.mrb[0].mxu0
    %v1537 = vadd.f32 0.0, %v1536
    %v1538 = vpop.f32.mrb[0].mxu0
    %1539 = vmatprep.mubr.f32.mxu0 0.0
    %1540 = vmatmul.mubr.f32.gmra.mrb[0].mxu0 %v161
    %v1541 = vpop.f32.mrb[0].mxu0
    %v1542 = vadd.f32 0.0, %v1541
    %v1543 = vpop.f32.mrb[0].mxu0
    %1544 = vmatprep.mubr.f32.mxu0 0.0
    %1545 = vmatmul.mubr.f32.gmra.mrb[0].mxu0 %v162
    %v1546 = vpop.f32.mrb[0].mxu0
    %v1547 = vadd.f32 0.0, %v1546
    %v1548 = vpop.f32.mrb[0].mxu0
    %1549 = vmatprep.mubr.f32.mxu0 0.0
    %1550 = vmatmul.mubr.f32.gmra.mrb[0].mxu0 %v163
    %v1551 = vpop.f32.mrb[0].mxu0
    %v1552 = vadd.f32 0.0, %v1551
    %v1553 = vpop.f32.mrb[0].mxu0
    %1554 = vmatprep.mubr.f32.mxu0 0.0
    %1555 = vmatmul.mubr.f32.gmra.mrb[0].mxu0 %v164
    %v1556 = vpop.f32.mrb[0].mxu0
    %v1557 = vadd.f32 0.0, %v1556
    %v1558 = vpop.f32.mrb[0].mxu0
    %1559 = vmatprep.mubr.f32.mxu0 0.0
    %1560 = vmatmul.mubr.f32.gmra.mrb[0].mxu0 %v165
    %v1561 = vpop.f32.mrb[0].mxu0
    %v1562 = vadd.f32 0.0, %v1561
    %v1563 = vpop.f32.mrb[0].mxu0
    %1564 = vmatprep.mubr.f32.mxu0 0.0
    %1565 = vmatmul.mubr.f32.gmra.mrb[0].mxu0 %v166
    %v1566 = vpop.f32.mrb[0].mxu0
    %v1567 = vadd.f32 0.0, %v1566
    %v1568 = vpop.f32.mrb[0].mxu0
    %1569 = vmatprep.mubr.f32.mxu0 0.0
    %1570 = vmatmul.mubr.f32.gmra.mrb[0].mxu0 %v167
    %v1571 = vpop.f32.mrb[0].mxu0
    %v1572 = vadd.f32 0.0, %v1571
    %v1573 = vpop.f32.mrb[0].mxu0
    %1574 = vmatprep.mubr.f32.mxu0 0.0
    %1575 = vmatmul.mubr.f32.gmra.mrb[0].mxu0 %v168
    %v1576 = vpop.f32.mrb[0].mxu0
    %v1577 = vadd.f32 0.0, %v1576
    %v1578 = vpop.f32.mrb[0].mxu0
    %1579 = vmatprep.mubr.f32.mxu0 0.0
    %1580 = vmatmul.mubr.f32.gmra.mrb[0].mxu0 %v169
    %v1581 = vpop.f32.mrb[0].mxu0
    %v1582 = vadd.f32 0.0, %v1581
    %v1583 = vpop.f32.mrb[0].mxu0
    %1584 = vmatprep.mubr.f32.mxu0 0.0
    %1585 = vmatmul.mubr.f32.gmra.mrb[0].mxu0 %v170
    %v1586 = vpop.f32.mrb[0].mxu0
    %v1587 = vadd.f32 0.0, %v1586
    %v1588 = vpop.f32.mrb[0].mxu0
    %1589 = vmatprep.mubr.f32.mxu0 0.0
    %1590 = vmatmul.mubr.f32.gmra.mrb[0].mxu0 %v171
    %v1591 = vpop.f32.mrb[0].mxu0
    %v1592 = vadd.f32 0.0, %v1591
    %v1593 = vpop.f32.mrb[0].mxu0
    %1594 = vdwg.mxu0
    %v1595 = vmul.f32 %v1517, %v658
    %v1596 = vmul.f32 %v1522, %v663
    %v1597 = vmul.f32 %v1527, %v668
    %v1598 = vmul.f32 %v1532, %v673
    %v1599 = vmul.f32 %v1537, %v678
    %v1600 = vmul.f32 %v1542, %v683
    %v1601 = vmul.f32 %v1547, %v688
    %v1602 = vmul.f32 %v1552, %v693
    %v1603 = vmul.f32 %v1557, %v698
    %v1604 = vmul.f32 %v1562, %v703
    %v1605 = vmul.f32 %v1567, %v708
    %v1606 = vmul.f32 %v1572, %v713
    %v1607 = vmul.f32 %v1577, %v718
    %v1608 = vmul.f32 %v1582, %v723
    %v1609 = vmul.f32 %v1587, %v728
    %v1610 = vmul.f32 %v1592, %v733
    %1611 = vmatprep.subr.mxu0 0.0
    %1612 = vmatpush1.msra.mxu0 %v1256
    %1613 = vmatprep.subr.mxu0 0.0
    %1614 = vmatpush1.msra.mxu0 %v1257
    %1615 = vmatprep.subr.mxu0 0.0
    %1616 = vmatpush1.msra.mxu0 %v1258
    %1617 = vmatprep.subr.mxu0 0.0
    %1618 = vmatpush1.msra.mxu0 %v1259
    %1619 = vmatprep.subr.mxu0 0.0
    %1620 = vmatpush1.msra.mxu0 %v1260
    %1621 = vmatprep.subr.mxu0 0.0
    %1622 = vmatpush1.msra.mxu0 %v1261
    %1623 = vmatprep.subr.mxu0 0.0
    %1624 = vmatpush1.msra.mxu0 %v1262
    %1625 = vmatprep.subr.mxu0 0.0
    %1626 = vmatpush1.msra.mxu0 %v1263
    %1627 = vmatprep.subr.mxu0 0.0
    %1628 = vmatpush1.msra.mxu0 %v1264
    %1629 = vmatprep.subr.mxu0 0.0
    %1630 = vmatpush1.msra.mxu0 %v1265
    %1631 = vmatprep.subr.mxu0 0.0
    %1632 = vmatpush1.msra.mxu0 %v1266
    %1633 = vmatprep.subr.mxu0 0.0
    %1634 = vmatpush1.msra.mxu0 %v1267
    %1635 = vmatprep.subr.mxu0 0.0
    %1636 = vmatpush1.msra.mxu0 %v1268
    %1637 = vmatprep.subr.mxu0 0.0
    %1638 = vmatpush1.msra.mxu0 %v1269
    %1639 = vmatprep.subr.mxu0 0.0
    %1640 = vmatpush1.msra.mxu0 %v1270
    %1641 = vmatprep.subr.mxu0 0.0
    %1642 = vmatpush1.msra.mxu0 %v1271
    %1643 = vmatprep.subr.mxu0 0.0
    %1644 = vmatpush1.msra.mxu0 0.0
    %1645 = vmatprep.subr.mxu0 0.0
    %1646 = vmatpush1.msra.mxu0 0.0
    %1647 = vmatprep.subr.mxu0 0.0
    %1648 = vmatpush1.msra.mxu0 0.0
    %1649 = vmatprep.subr.mxu0 0.0
    %1650 = vmatpush1.msra.mxu0 0.0
    %1651 = vmatprep.subr.mxu0 0.0
    %1652 = vmatpush1.msra.mxu0 0.0
    %1653 = vmatprep.subr.mxu0 0.0
    %1654 = vmatpush1.msra.mxu0 0.0
    %1655 = vmatprep.subr.mxu0 0.0
    %1656 = vmatpush1.msra.mxu0 0.0
    %1657 = vmatprep.subr.mxu0 0.0
    %1658 = vmatpush1.msra.mxu0 0.0
    %1659 = vmatprep.subr.mxu0 0.0
    %1660 = vmatpush1.msra.mxu0 0.0
    %1661 = vmatprep.subr.mxu0 0.0
    %1662 = vmatpush1.msra.mxu0 0.0
    %1663 = vmatprep.subr.mxu0 0.0
    %1664 = vmatpush1.msra.mxu0 0.0
    %1665 = vmatprep.subr.mxu0 0.0
    %1666 = vmatpush1.msra.mxu0 0.0
    %1667 = vmatprep.subr.mxu0 0.0
    %1668 = vmatpush1.msra.mxu0 0.0
    %1669 = vmatprep.subr.mxu0 0.0
    %1670 = vmatpush1.msra.mxu0 0.0
    %1671 = vmatprep.subr.mxu0 0.0
    %1672 = vmatpush1.msra.mxu0 0.0
    %1673 = vmatprep.subr.mxu0 0.0
    %1674 = vmatpush1.msra.mxu0 0.0
    %1675 = vmatprep.mubr.f32.mxu0 0.0
    %1676 = vmatmul.mubr.f32.gmra.mrb[0].mxu0 %v1595
    %v1677 = vpop.f32.mrb[0].mxu0
    %v1678 = vadd.f32 0.0, %v1677
    %v1679 = vpop.f32.mrb[0].mxu0
    %1680 = vmatprep.mubr.f32.mxu0 0.0
    %1681 = vmatmul.mubr.f32.gmra.mrb[0].mxu0 %v1596
    %v1682 = vpop.f32.mrb[0].mxu0
    %v1683 = vadd.f32 0.0, %v1682
    %v1684 = vpop.f32.mrb[0].mxu0
    %1685 = vmatprep.mubr.f32.mxu0 0.0
    %1686 = vmatmul.mubr.f32.gmra.mrb[0].mxu0 %v1597
    %v1687 = vpop.f32.mrb[0].mxu0
    %v1688 = vadd.f32 0.0, %v1687
    %v1689 = vpop.f32.mrb[0].mxu0
    %1690 = vmatprep.mubr.f32.mxu0 0.0
    %1691 = vmatmul.mubr.f32.gmra.mrb[0].mxu0 %v1598
    %v1692 = vpop.f32.mrb[0].mxu0
    %v1693 = vadd.f32 0.0, %v1692
    %v1694 = vpop.f32.mrb[0].mxu0
    %1695 = vmatprep.mubr.f32.mxu0 0.0
    %1696 = vmatmul.mubr.f32.gmra.mrb[0].mxu0 %v1599
    %v1697 = vpop.f32.mrb[0].mxu0
    %v1698 = vadd.f32 0.0, %v1697
    %v1699 = vpop.f32.mrb[0].mxu0
    %1700 = vmatprep.mubr.f32.mxu0 0.0
    %1701 = vmatmul.mubr.f32.gmra.mrb[0].mxu0 %v1600
    %v1702 = vpop.f32.mrb[0].mxu0
    %v1703 = vadd.f32 0.0, %v1702
    %v1704 = vpop.f32.mrb[0].mxu0
    %1705 = vmatprep.mubr.f32.mxu0 0.0
    %1706 = vmatmul.mubr.f32.gmra.mrb[0].mxu0 %v1601
    %v1707 = vpop.f32.mrb[0].mxu0
    %v1708 = vadd.f32 0.0, %v1707
    %v1709 = vpop.f32.mrb[0].mxu0
    %1710 = vmatprep.mubr.f32.mxu0 0.0
    %1711 = vmatmul.mubr.f32.gmra.mrb[0].mxu0 %v1602
    %v1712 = vpop.f32.mrb[0].mxu0
    %v1713 = vadd.f32 0.0, %v1712
    %v1714 = vpop.f32.mrb[0].mxu0
    %1715 = vmatprep.mubr.f32.mxu0 0.0
    %1716 = vmatmul.mubr.f32.gmra.mrb[0].mxu0 %v1603
    %v1717 = vpop.f32.mrb[0].mxu0
    %v1718 = vadd.f32 0.0, %v1717
    %v1719 = vpop.f32.mrb[0].mxu0
    %1720 = vmatprep.mubr.f32.mxu0 0.0
    %1721 = vmatmul.mubr.f32.gmra.mrb[0].mxu0 %v1604
    %v1722 = vpop.f32.mrb[0].mxu0
    %v1723 = vadd.f32 0.0, %v1722
    %v1724 = vpop.f32.mrb[0].mxu0
    %1725 = vmatprep.mubr.f32.mxu0 0.0
    %1726 = vmatmul.mubr.f32.gmra.mrb[0].mxu0 %v1605
    %v1727 = vpop.f32.mrb[0].mxu0
    %v1728 = vadd.f32 0.0, %v1727
    %v1729 = vpop.f32.mrb[0].mxu0
    %1730 = vmatprep.mubr.f32.mxu0 0.0
    %1731 = vmatmul.mubr.f32.gmra.mrb[0].mxu0 %v1606
    %v1732 = vpop.f32.mrb[0].mxu0
    %v1733 = vadd.f32 0.0, %v1732
    %v1734 = vpop.f32.mrb[0].mxu0
    %1735 = vmatprep.mubr.f32.mxu0 0.0
    %1736 = vmatmul.mubr.f32.gmra.mrb[0].mxu0 %v1607
    %v1737 = vpop.f32.mrb[0].mxu0
    %v1738 = vadd.f32 0.0, %v1737
    %v1739 = vpop.f32.mrb[0].mxu0
    %1740 = vmatprep.mubr.f32.mxu0 0.0
    %1741 = vmatmul.mubr.f32.gmra.mrb[0].mxu0 %v1608
    %v1742 = vpop.f32.mrb[0].mxu0
    %v1743 = vadd.f32 0.0, %v1742
    %v1744 = vpop.f32.mrb[0].mxu0
    %1745 = vmatprep.mubr.f32.mxu0 0.0
    %1746 = vmatmul.mubr.f32.gmra.mrb[0].mxu0 %v1609
    %v1747 = vpop.f32.mrb[0].mxu0
    %v1748 = vadd.f32 0.0, %v1747
    %v1749 = vpop.f32.mrb[0].mxu0
    %1750 = vmatprep.mubr.f32.mxu0 0.0
    %1751 = vmatmul.mubr.f32.gmra.mrb[0].mxu0 %v1610
    %v1752 = vpop.f32.mrb[0].mxu0
    %v1753 = vadd.f32 0.0, %v1752
    %v1754 = vpop.f32.mrb[0].mxu0
    %1755 = vdwg.mxu0
    %1756 = vmatprep.subr.mxu0 0.0
    %1757 = vmatpush1.msra.mxu0 %v1240
    %1758 = vmatprep.subr.mxu0 0.0
    %1759 = vmatpush1.msra.mxu0 %v1241
    %1760 = vmatprep.subr.mxu0 0.0
    %1761 = vmatpush1.msra.mxu0 %v1242
    %1762 = vmatprep.subr.mxu0 0.0
    %1763 = vmatpush1.msra.mxu0 %v1243
    %1764 = vmatprep.subr.mxu0 0.0
    %1765 = vmatpush1.msra.mxu0 %v1244
    %1766 = vmatprep.subr.mxu0 0.0
    %1767 = vmatpush1.msra.mxu0 %v1245
    %1768 = vmatprep.subr.mxu0 0.0
    %1769 = vmatpush1.msra.mxu0 %v1246
    %1770 = vmatprep.subr.mxu0 0.0
    %1771 = vmatpush1.msra.mxu0 %v1247
    %1772 = vmatprep.subr.mxu0 0.0
    %1773 = vmatpush1.msra.mxu0 %v1248
    %1774 = vmatprep.subr.mxu0 0.0
    %1775 = vmatpush1.msra.mxu0 %v1249
    %1776 = vmatprep.subr.mxu0 0.0
    %1777 = vmatpush1.msra.mxu0 %v1250
    %1778 = vmatprep.subr.mxu0 0.0
    %1779 = vmatpush1.msra.mxu0 %v1251
    %1780 = vmatprep.subr.mxu0 0.0
    %1781 = vmatpush1.msra.mxu0 %v1252
    %1782 = vmatprep.subr.mxu0 0.0
    %1783 = vmatpush1.msra.mxu0 %v1253
    %1784 = vmatprep.subr.mxu0 0.0
    %1785 = vmatpush1.msra.mxu0 %v1254
    %1786 = vmatprep.subr.mxu0 0.0
    %1787 = vmatpush1.msra.mxu0 %v1255
    %1788 = vmatprep.subr.mxu0 0.0
    %1789 = vmatpush1.msra.mxu0 0.0
    %1790 = vmatprep.subr.mxu0 0.0
    %1791 = vmatpush1.msra.mxu0 0.0
    %1792 = vmatprep.subr.mxu0 0.0
    %1793 = vmatpush1.msra.mxu0 0.0
    %1794 = vmatprep.subr.mxu0 0.0
    %1795 = vmatpush1.msra.mxu0 0.0
    %1796 = vmatprep.subr.mxu0 0.0
    %1797 = vmatpush1.msra.mxu0 0.0
    %1798 = vmatprep.subr.mxu0 0.0
    %1799 = vmatpush1.msra.mxu0 0.0
    %1800 = vmatprep.subr.mxu0 0.0
    %1801 = vmatpush1.msra.mxu0 0.0
    %1802 = vmatprep.subr.mxu0 0.0
    %1803 = vmatpush1.msra.mxu0 0.0
    %1804 = vmatprep.subr.mxu0 0.0
    %1805 = vmatpush1.msra.mxu0 0.0
    %1806 = vmatprep.subr.mxu0 0.0
    %1807 = vmatpush1.msra.mxu0 0.0
    %1808 = vmatprep.subr.mxu0 0.0
    %1809 = vmatpush1.msra.mxu0 0.0
    %1810 = vmatprep.subr.mxu0 0.0
    %1811 = vmatpush1.msra.mxu0 0.0
    %1812 = vmatprep.subr.mxu0 0.0
    %1813 = vmatpush1.msra.mxu0 0.0
    %1814 = vmatprep.subr.mxu0 0.0
    %1815 = vmatpush1.msra.mxu0 0.0
    %1816 = vmatprep.subr.mxu0 0.0
    %1817 = vmatpush1.msra.mxu0 0.0
    %1818 = vmatprep.subr.mxu0 0.0
    %1819 = vmatpush1.msra.mxu0 0.0
    %1820 = vmatprep.mubr.f32.mxu0 0.0
    %1821 = vmatmul.mubr.f32.gmra.mrb[0].mxu0 %v1434
    %v1822 = vpop.f32.mrb[0].mxu0
    %v1823 = vadd.f32 %v1678, %v1822
    %v1824 = vpop.f32.mrb[0].mxu0
    %1825 = vmatprep.mubr.f32.mxu0 0.0
    %1826 = vmatmul.mubr.f32.gmra.mrb[0].mxu0 %v1435
    %v1827 = vpop.f32.mrb[0].mxu0
    %v1828 = vadd.f32 %v1683, %v1827
    %v1829 = vpop.f32.mrb[0].mxu0
    %1830 = vmatprep.mubr.f32.mxu0 0.0
    %1831 = vmatmul.mubr.f32.gmra.mrb[0].mxu0 %v1436
    %v1832 = vpop.f32.mrb[0].mxu0
    %v1833 = vadd.f32 %v1688, %v1832
    %v1834 = vpop.f32.mrb[0].mxu0
    %1835 = vmatprep.mubr.f32.mxu0 0.0
    %1836 = vmatmul.mubr.f32.gmra.mrb[0].mxu0 %v1437
    %v1837 = vpop.f32.mrb[0].mxu0
    %v1838 = vadd.f32 %v1693, %v1837
    %v1839 = vpop.f32.mrb[0].mxu0
    %1840 = vmatprep.mubr.f32.mxu0 0.0
    %1841 = vmatmul.mubr.f32.gmra.mrb[0].mxu0 %v1438
    %v1842 = vpop.f32.mrb[0].mxu0
    %v1843 = vadd.f32 %v1698, %v1842
    %v1844 = vpop.f32.mrb[0].mxu0
    %1845 = vmatprep.mubr.f32.mxu0 0.0
    %1846 = vmatmul.mubr.f32.gmra.mrb[0].mxu0 %v1439
    %v1847 = vpop.f32.mrb[0].mxu0
    %v1848 = vadd.f32 %v1703, %v1847
    %v1849 = vpop.f32.mrb[0].mxu0
    %1850 = vmatprep.mubr.f32.mxu0 0.0
    %1851 = vmatmul.mubr.f32.gmra.mrb[0].mxu0 %v1440
    %v1852 = vpop.f32.mrb[0].mxu0
    %v1853 = vadd.f32 %v1708, %v1852
    %v1854 = vpop.f32.mrb[0].mxu0
    %1855 = vmatprep.mubr.f32.mxu0 0.0
    %1856 = vmatmul.mubr.f32.gmra.mrb[0].mxu0 %v1441
    %v1857 = vpop.f32.mrb[0].mxu0
    %v1858 = vadd.f32 %v1713, %v1857
    %v1859 = vpop.f32.mrb[0].mxu0
    %1860 = vmatprep.mubr.f32.mxu0 0.0
    %1861 = vmatmul.mubr.f32.gmra.mrb[0].mxu0 %v1442
    %v1862 = vpop.f32.mrb[0].mxu0
    %v1863 = vadd.f32 %v1718, %v1862
    %v1864 = vpop.f32.mrb[0].mxu0
    %1865 = vmatprep.mubr.f32.mxu0 0.0
    %1866 = vmatmul.mubr.f32.gmra.mrb[0].mxu0 %v1443
    %v1867 = vpop.f32.mrb[0].mxu0
    %v1868 = vadd.f32 %v1723, %v1867
    %v1869 = vpop.f32.mrb[0].mxu0
    %1870 = vmatprep.mubr.f32.mxu0 0.0
    %1871 = vmatmul.mubr.f32.gmra.mrb[0].mxu0 %v1444
    %v1872 = vpop.f32.mrb[0].mxu0
    %v1873 = vadd.f32 %v1728, %v1872
    %v1874 = vpop.f32.mrb[0].mxu0
    %1875 = vmatprep.mubr.f32.mxu0 0.0
    %1876 = vmatmul.mubr.f32.gmra.mrb[0].mxu0 %v1445
    %v1877 = vpop.f32.mrb[0].mxu0
    %v1878 = vadd.f32 %v1733, %v1877
    %v1879 = vpop.f32.mrb[0].mxu0
    %1880 = vmatprep.mubr.f32.mxu0 0.0
    %1881 = vmatmul.mubr.f32.gmra.mrb[0].mxu0 %v1446
    %v1882 = vpop.f32.mrb[0].mxu0
    %v1883 = vadd.f32 %v1738, %v1882
    %v1884 = vpop.f32.mrb[0].mxu0
    %1885 = vmatprep.mubr.f32.mxu0 0.0
    %1886 = vmatmul.mubr.f32.gmra.mrb[0].mxu0 %v1447
    %v1887 = vpop.f32.mrb[0].mxu0
    %v1888 = vadd.f32 %v1743, %v1887
    %v1889 = vpop.f32.mrb[0].mxu0
    %1890 = vmatprep.mubr.f32.mxu0 0.0
    %1891 = vmatmul.mubr.f32.gmra.mrb[0].mxu0 %v1448
    %v1892 = vpop.f32.mrb[0].mxu0
    %v1893 = vadd.f32 %v1748, %v1892
    %v1894 = vpop.f32.mrb[0].mxu0
    %1895 = vmatprep.mubr.f32.mxu0 0.0
    %1896 = vmatmul.mubr.f32.gmra.mrb[0].mxu0 %v1449
    %v1897 = vpop.f32.mrb[0].mxu0
    %v1898 = vadd.f32 %v1753, %v1897
    %v1899 = vpop.f32.mrb[0].mxu0
    %1900 = vdwg.mxu0
    %1901 = vmatprep.subr.mxu0 0.0
    %1902 = vmatpush1.msra.mxu0 %v1272
    %1903 = vmatprep.subr.mxu0 0.0
    %1904 = vmatpush1.msra.mxu0 %v1273
    %1905 = vmatprep.subr.mxu0 0.0
    %1906 = vmatpush1.msra.mxu0 %v1274
    %1907 = vmatprep.subr.mxu0 0.0
    %1908 = vmatpush1.msra.mxu0 %v1275
    %1909 = vmatprep.subr.mxu0 0.0
    %1910 = vmatpush1.msra.mxu0 %v1276
    %1911 = vmatprep.subr.mxu0 0.0
    %1912 = vmatpush1.msra.mxu0 %v1277
    %1913 = vmatprep.subr.mxu0 0.0
    %1914 = vmatpush1.msra.mxu0 %v1278
    %1915 = vmatprep.subr.mxu0 0.0
    %1916 = vmatpush1.msra.mxu0 %v1279
    %1917 = vmatprep.subr.mxu0 0.0
    %1918 = vmatpush1.msra.mxu0 %v1280
    %1919 = vmatprep.subr.mxu0 0.0
    %1920 = vmatpush1.msra.mxu0 %v1281
    %1921 = vmatprep.subr.mxu0 0.0
    %1922 = vmatpush1.msra.mxu0 %v1282
    %1923 = vmatprep.subr.mxu0 0.0
    %1924 = vmatpush1.msra.mxu0 %v1283
    %1925 = vmatprep.subr.mxu0 0.0
    %1926 = vmatpush1.msra.mxu0 %v1284
    %1927 = vmatprep.subr.mxu0 0.0
    %1928 = vmatpush1.msra.mxu0 %v1285
    %1929 = vmatprep.subr.mxu0 0.0
    %1930 = vmatpush1.msra.mxu0 %v1286
    %1931 = vmatprep.subr.mxu0 0.0
    %1932 = vmatpush1.msra.mxu0 %v1287
    %1933 = vmatprep.subr.mxu0 0.0
    %1934 = vmatpush1.msra.mxu0 0.0
    %1935 = vmatprep.subr.mxu0 0.0
    %1936 = vmatpush1.msra.mxu0 0.0
    %1937 = vmatprep.subr.mxu0 0.0
    %1938 = vmatpush1.msra.mxu0 0.0
    %1939 = vmatprep.subr.mxu0 0.0
    %1940 = vmatpush1.msra.mxu0 0.0
    %1941 = vmatprep.subr.mxu0 0.0
    %1942 = vmatpush1.msra.mxu0 0.0
    %1943 = vmatprep.subr.mxu0 0.0
    %1944 = vmatpush1.msra.mxu0 0.0
    %1945 = vmatprep.subr.mxu0 0.0
    %1946 = vmatpush1.msra.mxu0 0.0
    %1947 = vmatprep.subr.mxu0 0.0
    %1948 = vmatpush1.msra.mxu0 0.0
    %1949 = vmatprep.subr.mxu0 0.0
    %1950 = vmatpush1.msra.mxu0 0.0
    %1951 = vmatprep.subr.mxu0 0.0
    %1952 = vmatpush1.msra.mxu0 0.0
    %1953 = vmatprep.subr.mxu0 0.0
    %1954 = vmatpush1.msra.mxu0 0.0
    %1955 = vmatprep.subr.mxu0 0.0
    %1956 = vmatpush1.msra.mxu0 0.0
    %1957 = vmatprep.subr.mxu0 0.0
    %1958 = vmatpush1.msra.mxu0 0.0
    %1959 = vmatprep.subr.mxu0 0.0
    %1960 = vmatpush1.msra.mxu0 0.0
    %1961 = vmatprep.subr.mxu0 0.0
    %1962 = vmatpush1.msra.mxu0 0.0
    %1963 = vmatprep.subr.mxu0 0.0
    %1964 = vmatpush1.msra.mxu0 0.0
    %1965 = vmatprep.mubr.f32.mxu0 0.0
    %1966 = vmatmul.mubr.f32.gmra.mrb[0].mxu0 %v1224
    %v1967 = vpop.f32.mrb[0].mxu0
    %v1968 = vadd.f32 0.0, %v1967
    %v1969 = vpop.f32.mrb[0].mxu0
    %1970 = vmatprep.mubr.f32.mxu0 0.0
    %1971 = vmatmul.mubr.f32.gmra.mrb[0].mxu0 %v1225
    %v1972 = vpop.f32.mrb[0].mxu0
    %v1973 = vadd.f32 0.0, %v1972
    %v1974 = vpop.f32.mrb[0].mxu0
    %1975 = vmatprep.mubr.f32.mxu0 0.0
    %1976 = vmatmul.mubr.f32.gmra.mrb[0].mxu0 %v1226
    %v1977 = vpop.f32.mrb[0].mxu0
    %v1978 = vadd.f32 0.0, %v1977
    %v1979 = vpop.f32.mrb[0].mxu0
    %1980 = vmatprep.mubr.f32.mxu0 0.0
    %1981 = vmatmul.mubr.f32.gmra.mrb[0].mxu0 %v1227
    %v1982 = vpop.f32.mrb[0].mxu0
    %v1983 = vadd.f32 0.0, %v1982
    %v1984 = vpop.f32.mrb[0].mxu0
    %1985 = vmatprep.mubr.f32.mxu0 0.0
    %1986 = vmatmul.mubr.f32.gmra.mrb[0].mxu0 %v1228
    %v1987 = vpop.f32.mrb[0].mxu0
    %v1988 = vadd.f32 0.0, %v1987
    %v1989 = vpop.f32.mrb[0].mxu0
    %1990 = vmatprep.mubr.f32.mxu0 0.0
    %1991 = vmatmul.mubr.f32.gmra.mrb[0].mxu0 %v1229
    %v1992 = vpop.f32.mrb[0].mxu0
    %v1993 = vadd.f32 0.0, %v1992
    %v1994 = vpop.f32.mrb[0].mxu0
    %1995 = vmatprep.mubr.f32.mxu0 0.0
    %1996 = vmatmul.mubr.f32.gmra.mrb[0].mxu0 %v1230
    %v1997 = vpop.f32.mrb[0].mxu0
    %v1998 = vadd.f32 0.0, %v1997
    %v1999 = vpop.f32.mrb[0].mxu0
    %2000 = vmatprep.mubr.f32.mxu0 0.0
    %2001 = vmatmul.mubr.f32.gmra.mrb[0].mxu0 %v1231
    %v2002 = vpop.f32.mrb[0].mxu0
    %v2003 = vadd.f32 0.0, %v2002
    %v2004 = vpop.f32.mrb[0].mxu0
    %2005 = vmatprep.mubr.f32.mxu0 0.0
    %2006 = vmatmul.mubr.f32.gmra.mrb[0].mxu0 %v1232
    %v2007 = vpop.f32.mrb[0].mxu0
    %v2008 = vadd.f32 0.0, %v2007
    %v2009 = vpop.f32.mrb[0].mxu0
    %2010 = vmatprep.mubr.f32.mxu0 0.0
    %2011 = vmatmul.mubr.f32.gmra.mrb[0].mxu0 %v1233
    %v2012 = vpop.f32.mrb[0].mxu0
    %v2013 = vadd.f32 0.0, %v2012
    %v2014 = vpop.f32.mrb[0].mxu0
    %2015 = vmatprep.mubr.f32.mxu0 0.0
    %2016 = vmatmul.mubr.f32.gmra.mrb[0].mxu0 %v1234
    %v2017 = vpop.f32.mrb[0].mxu0
    %v2018 = vadd.f32 0.0, %v2017
    %v2019 = vpop.f32.mrb[0].mxu0
    %2020 = vmatprep.mubr.f32.mxu0 0.0
    %2021 = vmatmul.mubr.f32.gmra.mrb[0].mxu0 %v1235
    %v2022 = vpop.f32.mrb[0].mxu0
    %v2023 = vadd.f32 0.0, %v2022
    %v2024 = vpop.f32.mrb[0].mxu0
    %2025 = vmatprep.mubr.f32.mxu0 0.0
    %2026 = vmatmul.mubr.f32.gmra.mrb[0].mxu0 %v1236
    %v2027 = vpop.f32.mrb[0].mxu0
    %v2028 = vadd.f32 0.0, %v2027
    %v2029 = vpop.f32.mrb[0].mxu0
    %2030 = vmatprep.mubr.f32.mxu0 0.0
    %2031 = vmatmul.mubr.f32.gmra.mrb[0].mxu0 %v1237
    %v2032 = vpop.f32.mrb[0].mxu0
    %v2033 = vadd.f32 0.0, %v2032
    %v2034 = vpop.f32.mrb[0].mxu0
    %2035 = vmatprep.mubr.f32.mxu0 0.0
    %2036 = vmatmul.mubr.f32.gmra.mrb[0].mxu0 %v1238
    %v2037 = vpop.f32.mrb[0].mxu0
    %v2038 = vadd.f32 0.0, %v2037
    %v2039 = vpop.f32.mrb[0].mxu0
    %2040 = vmatprep.mubr.f32.mxu0 0.0
    %2041 = vmatmul.mubr.f32.gmra.mrb[0].mxu0 %v1239
    %v2042 = vpop.f32.mrb[0].mxu0
    %v2043 = vadd.f32 0.0, %v2042
    %v2044 = vpop.f32.mrb[0].mxu0
    %2045 = vdwg.mxu0
    %v2046 = vadd.f32 %v1823, %v1968
    %v2047 = vadd.f32 %v1828, %v1973
    %v2048 = vadd.f32 %v1833, %v1978
    %v2049 = vadd.f32 %v1838, %v1983
    %v2050 = vadd.f32 %v1843, %v1988
    %v2051 = vadd.f32 %v1848, %v1993
    %v2052 = vadd.f32 %v1853, %v1998
    %v2053 = vadd.f32 %v1858, %v2003
    %v2054 = vadd.f32 %v1863, %v2008
    %v2055 = vadd.f32 %v1868, %v2013
    %v2056 = vadd.f32 %v1873, %v2018
    %v2057 = vadd.f32 %v1878, %v2023
    %v2058 = vadd.f32 %v1883, %v2028
    %v2059 = vadd.f32 %v1888, %v2033
    %v2060 = vadd.f32 %v1893, %v2038
    %v2061 = vadd.f32 %v1898, %v2043
    %v2063 = vlaneseq
    %v2064 = vshrl.u32 %v2063, 7
    %v2065 = vsub.s32 0, %v2064
    %v2066 = vrot.slane %v1288, %v2065
    %v2068 = vadd.f32 %v2046, %v2066
    %v2069 = vadd.f32 %v2047, %v2066
    %v2070 = vadd.f32 %v2048, %v2066
    %v2071 = vadd.f32 %v2049, %v2066
    %v2072 = vadd.f32 %v2050, %v2066
    %v2073 = vadd.f32 %v2051, %v2066
    %v2074 = vadd.f32 %v2052, %v2066
    %v2075 = vadd.f32 %v2053, %v2066
    %v2076 = vadd.f32 %v2054, %v2066
    %v2077 = vadd.f32 %v2055, %v2066
    %v2078 = vadd.f32 %v2056, %v2066
    %v2079 = vadd.f32 %v2057, %v2066
    %v2080 = vadd.f32 %v2058, %v2066
    %v2081 = vadd.f32 %v2059, %v2066
    %v2082 = vadd.f32 %v2060, %v2066
    %v2083 = vadd.f32 %v2061, %v2066
    %v2084 = vtanh.pop %v2068
    %v2085 = vtanh.pop %v2069
    %v2086 = vtanh.pop %v2070
    %v2087 = vtanh.pop %v2071
    %v2088 = vtanh.pop %v2072
    %v2089 = vtanh.pop %v2073
    %v2090 = vtanh.pop %v2074
    %v2091 = vtanh.pop %v2075
    %v2092 = vtanh.pop %v2076
    %v2093 = vtanh.pop %v2077
    %v2094 = vtanh.pop %v2078
    %v2095 = vtanh.pop %v2079
    %v2096 = vtanh.pop %v2080
    %v2097 = vtanh.pop %v2081
    %v2098 = vtanh.pop %v2082
    %v2099 = vtanh.pop %v2083
    %2100 = vst [vmem:[#allocation14] sm:$0xff] %v2084
    %2101 = vst [vmem:[#allocation14 + $0x8] sm:$0xff] %v2085
    %2102 = vst [vmem:[#allocation14 + $0x10] sm:$0xff] %v2086
    %2103 = vst [vmem:[#allocation14 + $0x18] sm:$0xff] %v2087
    %2104 = vst [vmem:[#allocation14 + $0x20] sm:$0xff] %v2088
    %2105 = vst [vmem:[#allocation14 + $0x28] sm:$0xff] %v2089
    %2106 = vst [vmem:[#allocation14 + $0x30] sm:$0xff] %v2090
    %2107 = vst [vmem:[#allocation14 + $0x38] sm:$0xff] %v2091
    %2108 = vst [vmem:[#allocation14 + $0x40] sm:$0xff] %v2092
    %2109 = vst [vmem:[#allocation14 + $0x48] sm:$0xff] %v2093
    %2110 = vst [vmem:[#allocation14 + $0x50] sm:$0xff] %v2094
    %2111 = vst [vmem:[#allocation14 + $0x58] sm:$0xff] %v2095
    %2112 = vst [vmem:[#allocation14 + $0x60] sm:$0xff] %v2096
    %2113 = vst [vmem:[#allocation14 + $0x68] sm:$0xff] %v2097
    %2114 = vst [vmem:[#allocation14 + $0x70] sm:$0xff] %v2098
    %2115 = vst [vmem:[#allocation14 + $0x78] sm:$0xff] %v2099
    // Predicated region
    $region82: #{tpu_custom_call.1} parent=1 // pred_check
      _
    $region83: #{tpu_custom_call.1} parent=1 // pred_check_branch
      %2117 = sbr.rel (0) target = $region85
    $region84: #{tpu_custom_call.1} parent=1 // pred_region
      %s2119 = ssub.s32 2048, 2048
      %2120 = vsyncadd [#allocation4], %s2119
      %s2121 = sshll.u32 [#allocation14], 4
      %s2122 = int_to_ptr.vmem [resolvable:$true] %s2121
      %2127 = dma.vmem_to_hbm [thread:$0]  %s2122, 2048, %s13, [#allocation4], 128, 128, 8
    $region85: #{tpu_custom_call.1} parent=1 // pred_fallthru
      _
    // Predicated region
    $region86: #{tpu_custom_call.1} parent=1 // pred_check
      _
    $region87: #{tpu_custom_call.1} parent=1 // pred_check_branch
      %2129 = sbr.rel (0) target = $region89
    $region88: #{tpu_custom_call.1} parent=1 // pred_region
      %2130 = dma.done [#allocation4], 2048
    $region89: #{tpu_custom_call.1} parent=1 // pred_fallthru
      _
    %2131 = vsyncpa [#allocation3], 1
    %2132 = vsyncpa [#allocation6], 1
    %2133 = vsyncpa [#allocation9], 1
    %2134 = vsyncpa [#allocation12], 1
    %2135 = vsyncpa [#allocation4], 1

</llo_original>
